<compile_context>
chip_gen: v6e
topology: v6e:2x2x1
jax: 0.10.0
libtpu: 0.0.40
codegen_flags: <defaults>
</compile_context>

<pallas_src>
import functools

import numpy as np
import jax
import jax.numpy as jnp
from jax.experimental import pallas as pl
from jax.experimental.pallas import tpu as pltpu


# -----------------------------------------------------------------------------
# Pallas kernel: one batch element, all (atom, t) / (edge, t) rows at once.
# -----------------------------------------------------------------------------
def _decoder_kernel(x_ref, rt_ref, gs_ref, gr_ref, ga_ref,
                    w1s_ref, w1r_ref, b1_ref, w2_ref, b2_ref,
                    r_ref, s_ref,
                    wo1x_ref, wo1a_ref, bo1_ref,
                    wo2_ref, bo2_ref, wo3_ref, bo3_ref,
                    o_ref):
    f32 = jnp.float32
    x = x_ref[...]            # [N*T, D]   rows ordered (atom, t)
    rt = rt_ref[...]          # [E*T, K]   rows ordered (edge, t)

    # senders / receivers gather (time-block-expanded one-hot matrices, MXU)
    send = jnp.dot(gs_ref[...], x, preferred_element_type=f32)    # [E*T, D]
    recv = jnp.dot(gr_ref[...], x, preferred_element_type=f32)    # [E*T, D]

    # fused per-edge-type message MLP layer 1 (split dots replace the concat)
    h = jnp.dot(send, w1s_ref[...], preferred_element_type=f32)
    h = h + jnp.dot(recv, w1r_ref[...], preferred_element_type=f32)
    h = jnp.maximum(h + b1_ref[...], 0.0)                          # [E*T, K*H]

    # fused layer 2 (block-diagonal weight keeps edge types independent)
    m = jnp.dot(h, w2_ref[...], preferred_element_type=f32) + b2_ref[...]
    m = jnp.maximum(m, 0.0)                                        # [E*T, K*M]

    # weight by rel_type and sum over edge types: (m * (rt @ R)) @ S
    rt_exp = jnp.dot(rt, r_ref[...], preferred_element_type=f32)   # [E*T, K*M]
    all_msgs = jnp.dot(m * rt_exp, s_ref[...],
                       preferred_element_type=f32)                 # [E*T, M]

    # aggregate messages back to (atom, t) rows: pre-transposed rel_rec^T
    agg = jnp.dot(ga_ref[...], all_msgs, preferred_element_type=f32)  # [N*T, M]

    # output MLP (split dots replace cat([x, agg]))
    h1 = jnp.dot(x, wo1x_ref[...], preferred_element_type=f32)
    h1 = h1 + jnp.dot(agg, wo1a_ref[...], preferred_element_type=f32)
    h1 = jnp.maximum(h1 + bo1_ref[...], 0.0)
    h2 = jnp.maximum(
        jnp.dot(h1, wo2_ref[...], preferred_element_type=f32) + bo2_ref[...],
        0.0)
    pred = jnp.dot(h2, wo3_ref[...], preferred_element_type=f32) + bo3_ref[...]

    o_ref[...] = x + pred


def single_step_pallas(x_bnt, rt_flat, gather_mats, fused_params):
    """x_bnt: [B, N*Tp, D], rt_flat: [B, E*Tp, K] -> [B, N*Tp, D]."""
    B, NT, D = x_bnt.shape
    _, ET, K = rt_flat.shape
    Gs, Gr, Ga = gather_mats
    (W1s, W1r, b1s, W2bd, b2s, R, S,
     Wo1x, Wo1a, bo1, Wo2, bo2, Wo3, bo3) = fused_params
    KH = W1s.shape[1]
    KM = W2bd.shape[1]
    M = S.shape[1]
    NH = Wo1x.shape[1]

    const2 = lambda b: (0, 0)

    out = pl.pallas_call(
        _decoder_kernel,
        out_shape=jax.ShapeDtypeStruct((B, NT, D), jnp.float32),
        grid_spec=pltpu.PrefetchScalarGridSpec(
            num_scalar_prefetch=0,
            grid=(B,),
            in_specs=[
                pl.BlockSpec((pl.Squeezed(), NT, D), lambda b: (b, 0, 0)),  # x
                pl.BlockSpec((pl.Squeezed(), ET, K), lambda b: (b, 0, 0)),  # rel_type
                pl.BlockSpec((ET, NT), const2),                             # G_send
                pl.BlockSpec((ET, NT), const2),                             # G_recv
                pl.BlockSpec((NT, ET), const2),                             # G_agg (rel_rec^T)
                pl.BlockSpec((D, KH), const2),                              # W1 (send half)
                pl.BlockSpec((D, KH), const2),                              # W1 (recv half)
                pl.BlockSpec((1, KH), const2),                              # b1
                pl.BlockSpec((KH, KM), const2),                             # W2 block-diag
                pl.BlockSpec((1, KM), const2),                              # b2
                pl.BlockSpec((K, KM), const2),                              # R (rel_type expand)
                pl.BlockSpec((KM, M), const2),                              # S (sum over types)
                pl.BlockSpec((D, NH), const2),                              # Wo1 (x half)
                pl.BlockSpec((M, NH), const2),                              # Wo1 (agg half)
                pl.BlockSpec((1, NH), const2),                              # bo1
                pl.BlockSpec((NH, NH), const2),                             # Wo2
                pl.BlockSpec((1, NH), const2),                              # bo2
                pl.BlockSpec((NH, D), const2),                              # Wo3
                pl.BlockSpec((1, D), const2),                               # bo3
            ],
            out_specs=pl.BlockSpec((pl.Squeezed(), NT, D), lambda b: (b, 0, 0)),
        ),
        compiler_params=pltpu.CompilerParams(
            dimension_semantics=("parallel",)),
    )(x_bnt, rt_flat, Gs, Gr, Ga, W1s, W1r, b1s, W2bd, b2s, R, S,
      Wo1x, Wo1a, bo1, Wo2, bo2, Wo3, bo3)
    return out


# -----------------------------------------------------------------------------
# Host-side (one-time) parameter restructuring for the fused kernel.
# -----------------------------------------------------------------------------
def _prepare_fused_params(params, n_in_node, skip_first):
    W1, b1, W2, b2, Wo1, bo1, Wo2, bo2, Wo3, bo3 = params
    K, _, H = W1.shape
    D = n_in_node
    M = W2.shape[-1]

    # split cat([send, recv]) @ W1 into two partial dots; stack across types
    W1s = jnp.transpose(W1[:, :D, :], (1, 0, 2)).reshape(D, K * H)
    W1r = jnp.transpose(W1[:, D:, :], (1, 0, 2)).reshape(D, K * H)
    b1s = b1.reshape(1, K * H)

    # block-diagonal second message layer (fuses the per-edge-type loop)
    W2bd = jnp.zeros((K * H, K * M), jnp.float32)
    for k in range(K):
        W2bd = W2bd.at[k * H:(k + 1) * H, k * M:(k + 1) * M].set(W2[k])
    b2s = b2.reshape(1, K * M)

    # rel_type expansion (R) and sum-over-types (S); skip_first => zero cols
    start_idx = 1 if skip_first else 0
    R = np.zeros((K, K * M), np.float32)
    for k in range(start_idx, K):
        R[k, k * M:(k + 1) * M] = 1.0
    S = np.tile(np.eye(M, dtype=np.float32), (K, 1))            # [K*M, M]

    # split cat([x, agg]) @ Wo1
    Wo1x = Wo1[:D, :]
    Wo1a = Wo1[D:, :]

    return (W1s, W1r, b1s, W2bd, b2s, jnp.asarray(R), jnp.asarray(S),
            Wo1x, Wo1a, bo1, Wo2, bo2, Wo3, bo3)


# -----------------------------------------------------------------------------
# Full MLPDecoder.forward (no input transpose; native [B, N, T, D] layout).
# -----------------------------------------------------------------------------
def mlp_decoder_forward(inputs, rel_type, rel_rec, rel_send, params,
                        pred_steps=1, skip_first=False):
    """inputs: [B, N, T, D] (PyTorch NRI layout). Returns [B, N, T-1, D]."""
    B, N, T, D = inputs.shape
    E, K = rel_type.shape[1], rel_type.shape[2]
    assert pred_steps <= T

    fused = _prepare_fused_params(params, D, skip_first)

    # Slice the prediction start steps directly in native layout (no transpose).
    last_pred = inputs[:, :, 0::pred_steps, :]                # [B, N, Tp, D]
    Tp = last_pred.shape[2]
    NT, ET = N * Tp, E * Tp

    # Time-block-expanded gather matrices: one MXU dot handles every
    # (edge, t) / (atom, t) row of a batch element at once.
    eyeT = jnp.eye(Tp, dtype=jnp.float32)
    Gs = jnp.kron(rel_send, eyeT)                             # [E*Tp, N*Tp]
    Gr = jnp.kron(rel_rec, eyeT)                              # [E*Tp, N*Tp]
    Ga = jnp.kron(rel_rec.T, eyeT)                            # [N*Tp, E*Tp]

    # rel_type per (edge, t) row — tiny [B, E*Tp, K] (t-minor, matches kron).
    rt_flat = jnp.broadcast_to(rel_type[:, :, None, :],
                               (B, E, Tp, K)).reshape(B, ET, K)

    preds = []
    cur = last_pred.reshape(B, NT, D)                         # free reshape
    for _ in range(pred_steps):
        cur = single_step_pallas(cur, rt_flat, (Gs, Gr, Ga), fused)
        preds.append(cur.reshape(B, N, Tp, D))

    if pred_steps == 1:
        return preds[0][:, :, :T - 1, :]

    output = jnp.zeros((B, N, Tp * pred_steps, D), jnp.float32)
    for i in range(pred_steps):
        output = output.at[:, :, i::pred_steps, :].set(preds[i])
    return output[:, :, :T - 1, :]


# -----------------------------------------------------------------------------
# Plain-JAX reference (mirrors PyTorch code exactly) for verification.
# -----------------------------------------------------------------------------
def reference_forward(inputs, rel_type, rel_rec, rel_send, params,
                      pred_steps=1, skip_first=False):
    W1, b1, W2, b2, Wo1, bo1, Wo2, bo2, Wo3, bo3 = params
    B, N, T, D = inputs.shape
    E, K = rel_type.shape[1], rel_type.shape[2]
    x = jnp.transpose(inputs, (0, 2, 1, 3))
    rt = jnp.broadcast_to(rel_type[:, None, :, :], (B, T, E, K))

    def single_step(xi, rti):
        recv = jnp.einsum('en,btnd->bted', rel_rec, xi)
        send = jnp.einsum('en,btnd->bted', rel_send, xi)
        pre_msg = jnp.concatenate([send, recv], axis=-1)
        all_msgs = jnp.zeros(pre_msg.shape[:-1] + (W2.shape[-1],), jnp.float32)
        start = 1 if skip_first else 0
        for i in range(start, K):
            h = jax.nn.relu(pre_msg @ W1[i] + b1[i])
            m = jax.nn.relu(h @ W2[i] + b2[i])
            all_msgs = all_msgs + m * rti[..., i:i + 1]
        agg = jnp.einsum('en,btem->btnm', rel_rec, all_msgs)
        aug = jnp.concatenate([xi, agg], axis=-1)
        h1 = jax.nn.relu(aug @ Wo1 + bo1)
        h2 = jax.nn.relu(h1 @ Wo2 + bo2)
        return xi + (h2 @ Wo3 + bo3)

    last_pred = x[:, 0::pred_steps]
    curr_rel = rt[:, 0::pred_steps]
    preds = []
    for _ in range(pred_steps):
        last_pred = single_step(last_pred, curr_rel)
        preds.append(last_pred)
    Tp = preds[0].shape[1]
    output = jnp.zeros((B, Tp * pred_steps, N, D), jnp.float32)
    for i in range(pred_steps):
        output = output.at[:, i::pred_steps].set(preds[i])
    return jnp.transpose(output[:, :T - 1], (0, 2, 1, 3))


# -----------------------------------------------------------------------------
# Deterministic setup + run
# -----------------------------------------------------------------------------
if __name__ == "__main__":
    # Module hyperparameters
    n_in_node = 4      # D
    edge_types = 2     # K
    msg_hid = 32
    msg_out = 32
    n_hid = 32
    num_atoms = 5      # N
    num_steps = 8      # T
    batch = 2          # B
    pred_steps = 1

    num_edges = num_atoms * (num_atoms - 1)  # 20

    # NRI relation matrices (one-hot, off-diagonal pairs)
    off_diag = np.ones((num_atoms, num_atoms)) - np.eye(num_atoms)
    recv_idx, send_idx = np.where(off_diag)
    rel_rec_np = np.zeros((num_edges, num_atoms), np.float32)
    rel_send_np = np.zeros((num_edges, num_atoms), np.float32)
    rel_rec_np[np.arange(num_edges), recv_idx] = 1.0
    rel_send_np[np.arange(num_edges), send_idx] = 1.0
    rel_rec = jnp.asarray(rel_rec_np)
    rel_send = jnp.asarray(rel_send_np)

    key = jax.random.PRNGKey(0)
    keys = jax.random.split(key, 14)

    # Parameters (stored transposed vs PyTorch so kernel does x @ W).
    W1 = jax.random.normal(keys[0], (edge_types, 2 * n_in_node, msg_hid),
                           jnp.float32) * 0.2
    b1 = jax.random.normal(keys[1], (edge_types, 1, msg_hid), jnp.float32) * 0.05
    W2 = jax.random.normal(keys[2], (edge_types, msg_hid, msg_out),
                           jnp.float32) * 0.2
    b2 = jax.random.normal(keys[3], (edge_types, 1, msg_out), jnp.float32) * 0.05
    Wo1 = jax.random.normal(keys[4], (n_in_node + msg_out, n_hid),
                            jnp.float32) * 0.2
    bo1 = jax.random.normal(keys[5], (1, n_hid), jnp.float32) * 0.05
    Wo2 = jax.random.normal(keys[6], (n_hid, n_hid), jnp.float32) * 0.2
    bo2 = jax.random.normal(keys[7], (1, n_hid), jnp.float32) * 0.05
    Wo3 = jax.random.normal(keys[8], (n_hid, n_in_node), jnp.float32) * 0.2
    bo3 = jax.random.normal(keys[9], (1, n_in_node), jnp.float32) * 0.05
    params = (W1, b1, W2, b2, Wo1, bo1, Wo2, bo2, Wo3, bo3)

    # Inputs: [B, num_atoms, num_timesteps, num_dims]  (PyTorch NRI layout)
    inputs = jax.random.normal(keys[10],
                               (batch, num_atoms, num_steps, n_in_node),
                               jnp.float32)
    # rel_type: [B, num_edges, edge_types] — edge-type distribution
    rel_type = jax.nn.softmax(
        jax.random.normal(keys[11], (batch, num_edges, edge_types), jnp.float32),
        axis=-1)

    for skip_first in (False, True):
        fwd = jax.jit(functools.partial(mlp_decoder_forward,
                                        pred_steps=pred_steps,
                                        skip_first=skip_first))
        out = jax.block_until_ready(fwd(inputs, rel_type, rel_rec, rel_send,
                                        params))
        ref = jax.block_until_ready(
            reference_forward(inputs, rel_type, rel_rec, rel_send, params,
                              pred_steps=pred_steps, skip_first=skip_first))
        assert out.shape == (batch, num_atoms, num_steps - 1, n_in_node), out.shape
        np.testing.assert_allclose(np.asarray(out), np.asarray(ref),
                                   rtol=1e-3, atol=1e-3)

    print("KERNEL_OK")
</pallas_src>

<mosaic_0001>
module attributes {stable_mosaic.version = 11 : i64} {
  func.func @_decoder_kernel(%arg0: i32, %arg1: memref<1x40x4xf32, #tpu.memory_space<vmem>>, %arg2: memref<1x160x2xf32, #tpu.memory_space<vmem>>, %arg3: memref<160x40xf32, #tpu.memory_space<vmem>>, %arg4: memref<160x40xf32, #tpu.memory_space<vmem>>, %arg5: memref<40x160xf32, #tpu.memory_space<vmem>>, %arg6: memref<4x64xf32, #tpu.memory_space<vmem>>, %arg7: memref<4x64xf32, #tpu.memory_space<vmem>>, %arg8: memref<1x64xf32, #tpu.memory_space<vmem>>, %arg9: memref<64x64xf32, #tpu.memory_space<vmem>>, %arg10: memref<1x64xf32, #tpu.memory_space<vmem>>, %arg11: memref<2x64xf32, #tpu.memory_space<vmem>>, %arg12: memref<64x32xf32, #tpu.memory_space<vmem>>, %arg13: memref<4x32xf32, #tpu.memory_space<vmem>>, %arg14: memref<32x32xf32, #tpu.memory_space<vmem>>, %arg15: memref<1x32xf32, #tpu.memory_space<vmem>>, %arg16: memref<32x32xf32, #tpu.memory_space<vmem>>, %arg17: memref<1x32xf32, #tpu.memory_space<vmem>>, %arg18: memref<32x4xf32, #tpu.memory_space<vmem>>, %arg19: memref<1x4xf32, #tpu.memory_space<vmem>>, %arg20: memref<1x40x4xf32, #tpu.memory_space<vmem>>) attributes {dimension_semantics = [#tpu.dimension_semantics<parallel>], iteration_bounds = array<i64: 2>, scalar_prefetch = 0 : i64, scratch_operands = 0 : i64, tpu.core_type = #tpu.core_type<tc>, window_params = [{transform_indices = @transform_0, window_bounds = array<i64: 1, 40, 4>}, {transform_indices = @transform_1, window_bounds = array<i64: 1, 160, 2>}, {pipeline_mode = #tpu.pipeline_mode<synchronous>, transform_indices = @transform_2, window_bounds = array<i64: 160, 40>}, {pipeline_mode = #tpu.pipeline_mode<synchronous>, transform_indices = @transform_3, window_bounds = array<i64: 160, 40>}, {pipeline_mode = #tpu.pipeline_mode<synchronous>, transform_indices = @transform_4, window_bounds = array<i64: 40, 160>}, {pipeline_mode = #tpu.pipeline_mode<synchronous>, transform_indices = @transform_5, window_bounds = array<i64: 4, 64>}, {pipeline_mode = #tpu.pipeline_mode<synchronous>, transform_indices = @transform_6, window_bounds = array<i64: 4, 64>}, {pipeline_mode = #tpu.pipeline_mode<synchronous>, transform_indices = @transform_7, window_bounds = array<i64: 1, 64>}, {pipeline_mode = #tpu.pipeline_mode<synchronous>, transform_indices = @transform_8, window_bounds = array<i64: 64, 64>}, {pipeline_mode = #tpu.pipeline_mode<synchronous>, transform_indices = @transform_9, window_bounds = array<i64: 1, 64>}, {pipeline_mode = #tpu.pipeline_mode<synchronous>, transform_indices = @transform_10, window_bounds = array<i64: 2, 64>}, {pipeline_mode = #tpu.pipeline_mode<synchronous>, transform_indices = @transform_11, window_bounds = array<i64: 64, 32>}, {pipeline_mode = #tpu.pipeline_mode<synchronous>, transform_indices = @transform_12, window_bounds = array<i64: 4, 32>}, {pipeline_mode = #tpu.pipeline_mode<synchronous>, transform_indices = @transform_13, window_bounds = array<i64: 32, 32>}, {pipeline_mode = #tpu.pipeline_mode<synchronous>, transform_indices = @transform_14, window_bounds = array<i64: 1, 32>}, {pipeline_mode = #tpu.pipeline_mode<synchronous>, transform_indices = @transform_15, window_bounds = array<i64: 32, 32>}, {pipeline_mode = #tpu.pipeline_mode<synchronous>, transform_indices = @transform_16, window_bounds = array<i64: 1, 32>}, {pipeline_mode = #tpu.pipeline_mode<synchronous>, transform_indices = @transform_17, window_bounds = array<i64: 32, 4>}, {pipeline_mode = #tpu.pipeline_mode<synchronous>, transform_indices = @transform_18, window_bounds = array<i64: 1, 4>}, {transform_indices = @transform_19, window_bounds = array<i64: 1, 40, 4>}]} {
    %c0 = arith.constant 0 : index
    %c0_0 = arith.constant 0 : index
    %c0_1 = arith.constant 0 : index
    %0 = vector.load %arg1[%c0, %c0_0, %c0_1] : memref<1x40x4xf32, #tpu.memory_space<vmem>>, vector<1x40x4xf32>
    %1 = vector.shape_cast %0 : vector<1x40x4xf32> to vector<40x4xf32>
    %c0_2 = arith.constant 0 : index
    %c0_3 = arith.constant 0 : index
    %c0_4 = arith.constant 0 : index
    %2 = vector.load %arg2[%c0_2, %c0_3, %c0_4] : memref<1x160x2xf32, #tpu.memory_space<vmem>>, vector<1x160x2xf32>
    %3 = vector.shape_cast %2 : vector<1x160x2xf32> to vector<160x2xf32>
    %c0_5 = arith.constant 0 : index
    %c0_6 = arith.constant 0 : index
    %4 = vector.load %arg3[%c0_5, %c0_6] : memref<160x40xf32, #tpu.memory_space<vmem>>, vector<160x40xf32>
    %cst = arith.constant dense<0.000000e+00> : vector<160x4xf32>
    %5 = tpu.matmul %4, %1, %cst {dimension_numbers = #tpu.dot_dimension_numbers<[1], [0], [0], [1], [0, 0, 1, 1], [], []>} : vector<160x40xf32>, vector<40x4xf32>, vector<160x4xf32> -> vector<160x4xf32>
    %c0_7 = arith.constant 0 : index
    %c0_8 = arith.constant 0 : index
    %6 = vector.load %arg4[%c0_7, %c0_8] : memref<160x40xf32, #tpu.memory_space<vmem>>, vector<160x40xf32>
    %cst_9 = arith.constant dense<0.000000e+00> : vector<160x4xf32>
    %7 = tpu.matmul %6, %1, %cst_9 {dimension_numbers = #tpu.dot_dimension_numbers<[1], [0], [0], [1], [0, 0, 1, 1], [], []>} : vector<160x40xf32>, vector<40x4xf32>, vector<160x4xf32> -> vector<160x4xf32>
    %c0_10 = arith.constant 0 : index
    %c0_11 = arith.constant 0 : index
    %8 = vector.load %arg6[%c0_10, %c0_11] : memref<4x64xf32, #tpu.memory_space<vmem>>, vector<4x64xf32>
    %cst_12 = arith.constant dense<0.000000e+00> : vector<160x64xf32>
    %9 = tpu.matmul %5, %8, %cst_12 {dimension_numbers = #tpu.dot_dimension_numbers<[1], [0], [0], [1], [0, 0, 1, 1], [], []>} : vector<160x4xf32>, vector<4x64xf32>, vector<160x64xf32> -> vector<160x64xf32>
    %c0_13 = arith.constant 0 : index
    %c0_14 = arith.constant 0 : index
    %10 = vector.load %arg7[%c0_13, %c0_14] : memref<4x64xf32, #tpu.memory_space<vmem>>, vector<4x64xf32>
    %cst_15 = arith.constant dense<0.000000e+00> : vector<160x64xf32>
    %11 = tpu.matmul %7, %10, %cst_15 {dimension_numbers = #tpu.dot_dimension_numbers<[1], [0], [0], [1], [0, 0, 1, 1], [], []>} : vector<160x4xf32>, vector<4x64xf32>, vector<160x64xf32> -> vector<160x64xf32>
    %12 = arith.addf %9, %11 : vector<160x64xf32>
    %c0_16 = arith.constant 0 : index
    %c0_17 = arith.constant 0 : index
    %13 = vector.load %arg8[%c0_16, %c0_17] : memref<1x64xf32, #tpu.memory_space<vmem>>, vector<1x64xf32>
    %14 = vector.broadcast %13 : vector<1x64xf32> to vector<160x64xf32>
    %15 = arith.addf %12, %14 : vector<160x64xf32>
    %cst_18 = arith.constant 0.000000e+00 : f32
    %16 = vector.broadcast %cst_18 : f32 to vector<160x64xf32>
    %17 = arith.maximumf %15, %16 : vector<160x64xf32>
    %c0_19 = arith.constant 0 : index
    %c0_20 = arith.constant 0 : index
    %18 = vector.load %arg9[%c0_19, %c0_20] : memref<64x64xf32, #tpu.memory_space<vmem>>, vector<64x64xf32>
    %cst_21 = arith.constant dense<0.000000e+00> : vector<160x64xf32>
    %19 = tpu.matmul %17, %18, %cst_21 {dimension_numbers = #tpu.dot_dimension_numbers<[1], [0], [0], [1], [0, 0, 1, 1], [], []>} : vector<160x64xf32>, vector<64x64xf32>, vector<160x64xf32> -> vector<160x64xf32>
    %c0_22 = arith.constant 0 : index
    %c0_23 = arith.constant 0 : index
    %20 = vector.load %arg10[%c0_22, %c0_23] : memref<1x64xf32, #tpu.memory_space<vmem>>, vector<1x64xf32>
    %21 = vector.broadcast %20 : vector<1x64xf32> to vector<160x64xf32>
    %22 = arith.addf %19, %21 : vector<160x64xf32>
    %cst_24 = arith.constant 0.000000e+00 : f32
    %23 = vector.broadcast %cst_24 : f32 to vector<160x64xf32>
    %24 = arith.maximumf %22, %23 : vector<160x64xf32>
    %c0_25 = arith.constant 0 : index
    %c0_26 = arith.constant 0 : index
    %25 = vector.load %arg11[%c0_25, %c0_26] : memref<2x64xf32, #tpu.memory_space<vmem>>, vector<2x64xf32>
    %cst_27 = arith.constant dense<0.000000e+00> : vector<160x64xf32>
    %26 = tpu.matmul %3, %25, %cst_27 {dimension_numbers = #tpu.dot_dimension_numbers<[1], [0], [0], [1], [0, 0, 1, 1], [], []>} : vector<160x2xf32>, vector<2x64xf32>, vector<160x64xf32> -> vector<160x64xf32>
    %27 = arith.mulf %24, %26 : vector<160x64xf32>
    %c0_28 = arith.constant 0 : index
    %c0_29 = arith.constant 0 : index
    %28 = vector.load %arg12[%c0_28, %c0_29] : memref<64x32xf32, #tpu.memory_space<vmem>>, vector<64x32xf32>
    %cst_30 = arith.constant dense<0.000000e+00> : vector<160x32xf32>
    %29 = tpu.matmul %27, %28, %cst_30 {dimension_numbers = #tpu.dot_dimension_numbers<[1], [0], [0], [1], [0, 0, 1, 1], [], []>} : vector<160x64xf32>, vector<64x32xf32>, vector<160x32xf32> -> vector<160x32xf32>
    %c0_31 = arith.constant 0 : index
    %c0_32 = arith.constant 0 : index
    %30 = vector.load %arg5[%c0_31, %c0_32] : memref<40x160xf32, #tpu.memory_space<vmem>>, vector<40x160xf32>
    %cst_33 = arith.constant dense<0.000000e+00> : vector<40x32xf32>
    %31 = tpu.matmul %30, %29, %cst_33 {dimension_numbers = #tpu.dot_dimension_numbers<[1], [0], [0], [1], [0, 0, 1, 1], [], []>} : vector<40x160xf32>, vector<160x32xf32>, vector<40x32xf32> -> vector<40x32xf32>
    %c0_34 = arith.constant 0 : index
    %c0_35 = arith.constant 0 : index
    %32 = vector.load %arg13[%c0_34, %c0_35] : memref<4x32xf32, #tpu.memory_space<vmem>>, vector<4x32xf32>
    %cst_36 = arith.constant dense<0.000000e+00> : vector<40x32xf32>
    %33 = tpu.matmul %1, %32, %cst_36 {dimension_numbers = #tpu.dot_dimension_numbers<[1], [0], [0], [1], [0, 0, 1, 1], [], []>} : vector<40x4xf32>, vector<4x32xf32>, vector<40x32xf32> -> vector<40x32xf32>
    %c0_37 = arith.constant 0 : index
    %c0_38 = arith.constant 0 : index
    %34 = vector.load %arg14[%c0_37, %c0_38] : memref<32x32xf32, #tpu.memory_space<vmem>>, vector<32x32xf32>
    %cst_39 = arith.constant dense<0.000000e+00> : vector<40x32xf32>
    %35 = tpu.matmul %31, %34, %cst_39 {dimension_numbers = #tpu.dot_dimension_numbers<[1], [0], [0], [1], [0, 0, 1, 1], [], []>} : vector<40x32xf32>, vector<32x32xf32>, vector<40x32xf32> -> vector<40x32xf32>
    %36 = arith.addf %33, %35 : vector<40x32xf32>
    %c0_40 = arith.constant 0 : index
    %c0_41 = arith.constant 0 : index
    %37 = vector.load %arg15[%c0_40, %c0_41] : memref<1x32xf32, #tpu.memory_space<vmem>>, vector<1x32xf32>
    %38 = vector.broadcast %37 : vector<1x32xf32> to vector<40x32xf32>
    %39 = arith.addf %36, %38 : vector<40x32xf32>
    %cst_42 = arith.constant 0.000000e+00 : f32
    %40 = vector.broadcast %cst_42 : f32 to vector<40x32xf32>
    %41 = arith.maximumf %39, %40 : vector<40x32xf32>
    %c0_43 = arith.constant 0 : index
    %c0_44 = arith.constant 0 : index
    %42 = vector.load %arg16[%c0_43, %c0_44] : memref<32x32xf32, #tpu.memory_space<vmem>>, vector<32x32xf32>
    %cst_45 = arith.constant dense<0.000000e+00> : vector<40x32xf32>
    %43 = tpu.matmul %41, %42, %cst_45 {dimension_numbers = #tpu.dot_dimension_numbers<[1], [0], [0], [1], [0, 0, 1, 1], [], []>} : vector<40x32xf32>, vector<32x32xf32>, vector<40x32xf32> -> vector<40x32xf32>
    %c0_46 = arith.constant 0 : index
    %c0_47 = arith.constant 0 : index
    %44 = vector.load %arg17[%c0_46, %c0_47] : memref<1x32xf32, #tpu.memory_space<vmem>>, vector<1x32xf32>
    %45 = vector.broadcast %44 : vector<1x32xf32> to vector<40x32xf32>
    %46 = arith.addf %43, %45 : vector<40x32xf32>
    %cst_48 = arith.constant 0.000000e+00 : f32
    %47 = vector.broadcast %cst_48 : f32 to vector<40x32xf32>
    %48 = arith.maximumf %46, %47 : vector<40x32xf32>
    %c0_49 = arith.constant 0 : index
    %c0_50 = arith.constant 0 : index
    %49 = vector.load %arg18[%c0_49, %c0_50] : memref<32x4xf32, #tpu.memory_space<vmem>>, vector<32x4xf32>
    %cst_51 = arith.constant dense<0.000000e+00> : vector<40x4xf32>
    %50 = tpu.matmul %48, %49, %cst_51 {dimension_numbers = #tpu.dot_dimension_numbers<[1], [0], [0], [1], [0, 0, 1, 1], [], []>} : vector<40x32xf32>, vector<32x4xf32>, vector<40x4xf32> -> vector<40x4xf32>
    %c0_52 = arith.constant 0 : index
    %c0_53 = arith.constant 0 : index
    %51 = vector.load %arg19[%c0_52, %c0_53] : memref<1x4xf32, #tpu.memory_space<vmem>>, vector<1x4xf32>
    %52 = vector.broadcast %51 : vector<1x4xf32> to vector<40x4xf32>
    %53 = arith.addf %50, %52 : vector<40x4xf32>
    %54 = arith.addf %1, %53 : vector<40x4xf32>
    %c0_54 = arith.constant 0 : index
    %c0_55 = arith.constant 0 : index
    %c0_56 = arith.constant 0 : index
    %55 = vector.load %arg20[%c0_54, %c0_55, %c0_56] : memref<1x40x4xf32, #tpu.memory_space<vmem>>, vector<1x40x4xf32>
    %56 = vector.shape_cast %55 : vector<1x40x4xf32> to vector<40x4xf32>
    %57 = vector.shape_cast %54 : vector<40x4xf32> to vector<1x40x4xf32>
    tpu.vector_store %arg20[%c0_54, %c0_55, %c0_56], %57 {strides = array<i32>} : memref<1x40x4xf32, #tpu.memory_space<vmem>>, vector<1x40x4xf32>,
    return
  }
  func.func @transform_0(%arg0: i32) -> (i32, i32, i32) {
    %c0_i32 = arith.constant 0 : i32
    %c0_i32_0 = arith.constant 0 : i32
    %c0_i32_1 = arith.constant 0 : i32
    return %arg0, %c0_i32, %c0_i32_0 : i32, i32, i32
  }
  func.func @transform_1(%arg0: i32) -> (i32, i32, i32) {
    %c0_i32 = arith.constant 0 : i32
    %c0_i32_0 = arith.constant 0 : i32
    %c0_i32_1 = arith.constant 0 : i32
    return %arg0, %c0_i32, %c0_i32_0 : i32, i32, i32
  }
  func.func @transform_2(%arg0: i32) -> (i32, i32) {
    %c0_i32 = arith.constant 0 : i32
    %c0_i32_0 = arith.constant 0 : i32
    %c0_i32_1 = arith.constant 0 : i32
    return %c0_i32, %c0_i32_0 : i32, i32
  }
  func.func @transform_3(%arg0: i32) -> (i32, i32) {
    %c0_i32 = arith.constant 0 : i32
    %c0_i32_0 = arith.constant 0 : i32
    %c0_i32_1 = arith.constant 0 : i32
    return %c0_i32, %c0_i32_0 : i32, i32
  }
  func.func @transform_4(%arg0: i32) -> (i32, i32) {
    %c0_i32 = arith.constant 0 : i32
    %c0_i32_0 = arith.constant 0 : i32
    %c0_i32_1 = arith.constant 0 : i32
    return %c0_i32, %c0_i32_0 : i32, i32
  }
  func.func @transform_5(%arg0: i32) -> (i32, i32) {
    %c0_i32 = arith.constant 0 : i32
    %c0_i32_0 = arith.constant 0 : i32
    %c0_i32_1 = arith.constant 0 : i32
    return %c0_i32, %c0_i32_0 : i32, i32
  }
  func.func @transform_6(%arg0: i32) -> (i32, i32) {
    %c0_i32 = arith.constant 0 : i32
    %c0_i32_0 = arith.constant 0 : i32
    %c0_i32_1 = arith.constant 0 : i32
    return %c0_i32, %c0_i32_0 : i32, i32
  }
  func.func @transform_7(%arg0: i32) -> (i32, i32) {
    %c0_i32 = arith.constant 0 : i32
    %c0_i32_0 = arith.constant 0 : i32
    %c0_i32_1 = arith.constant 0 : i32
    return %c0_i32, %c0_i32_0 : i32, i32
  }
  func.func @transform_8(%arg0: i32) -> (i32, i32) {
    %c0_i32 = arith.constant 0 : i32
    %c0_i32_0 = arith.constant 0 : i32
    %c0_i32_1 = arith.constant 0 : i32
    return %c0_i32, %c0_i32_0 : i32, i32
  }
  func.func @transform_9(%arg0: i32) -> (i32, i32) {
    %c0_i32 = arith.constant 0 : i32
    %c0_i32_0 = arith.constant 0 : i32
    %c0_i32_1 = arith.constant 0 : i32
    return %c0_i32, %c0_i32_0 : i32, i32
  }
  func.func @transform_10(%arg0: i32) -> (i32, i32) {
    %c0_i32 = arith.constant 0 : i32
    %c0_i32_0 = arith.constant 0 : i32
    %c0_i32_1 = arith.constant 0 : i32
    return %c0_i32, %c0_i32_0 : i32, i32
  }
  func.func @transform_11(%arg0: i32) -> (i32, i32) {
    %c0_i32 = arith.constant 0 : i32
    %c0_i32_0 = arith.constant 0 : i32
    %c0_i32_1 = arith.constant 0 : i32
    return %c0_i32, %c0_i32_0 : i32, i32
  }
  func.func @transform_12(%arg0: i32) -> (i32, i32) {
    %c0_i32 = arith.constant 0 : i32
    %c0_i32_0 = arith.constant 0 : i32
    %c0_i32_1 = arith.constant 0 : i32
    return %c0_i32, %c0_i32_0 : i32, i32
  }
  func.func @transform_13(%arg0: i32) -> (i32, i32) {
    %c0_i32 = arith.constant 0 : i32
    %c0_i32_0 = arith.constant 0 : i32
    %c0_i32_1 = arith.constant 0 : i32
    return %c0_i32, %c0_i32_0 : i32, i32
  }
  func.func @transform_14(%arg0: i32) -> (i32, i32) {
    %c0_i32 = arith.constant 0 : i32
    %c0_i32_0 = arith.constant 0 : i32
    %c0_i32_1 = arith.constant 0 : i32
    return %c0_i32, %c0_i32_0 : i32, i32
  }
  func.func @transform_15(%arg0: i32) -> (i32, i32) {
    %c0_i32 = arith.constant 0 : i32
    %c0_i32_0 = arith.constant 0 : i32
    %c0_i32_1 = arith.constant 0 : i32
    return %c0_i32, %c0_i32_0 : i32, i32
  }
  func.func @transform_16(%arg0: i32) -> (i32, i32) {
    %c0_i32 = arith.constant 0 : i32
    %c0_i32_0 = arith.constant 0 : i32
    %c0_i32_1 = arith.constant 0 : i32
    return %c0_i32, %c0_i32_0 : i32, i32
  }
  func.func @transform_17(%arg0: i32) -> (i32, i32) {
    %c0_i32 = arith.constant 0 : i32
    %c0_i32_0 = arith.constant 0 : i32
    %c0_i32_1 = arith.constant 0 : i32
    return %c0_i32, %c0_i32_0 : i32, i32
  }
  func.func @transform_18(%arg0: i32) -> (i32, i32) {
    %c0_i32 = arith.constant 0 : i32
    %c0_i32_0 = arith.constant 0 : i32
    %c0_i32_1 = arith.constant 0 : i32
    return %c0_i32, %c0_i32_0 : i32, i32
  }
  func.func @transform_19(%arg0: i32) -> (i32, i32, i32) {
    %c0_i32 = arith.constant 0 : i32
    %c0_i32_0 = arith.constant 0 : i32
    %c0_i32_1 = arith.constant 0 : i32
    return %arg0, %c0_i32, %c0_i32_0 : i32, i32, i32
  }
}

</mosaic_0001>

<llo_original>
// kernel: mlp_decoder_forward.1
$region0: #{mlp_decoder_forward.1}
  #allocation0 [shape = 'u32[]', space=smem, size = 0x4, offset = 0x4, fixed_abs, tag = 'smem constant byte address 0x4 - core index']
  #allocation1 [shape = 'u32[144,128]{1,0:T(1,128)}', space=vmem, size = 0x12000, scoped, tag = 'internal scratch']
  %s0 = inlined_call_operand.vmem [shape: f32[2,40,4], index: 0, kind: input, shape index: {}]
  %s1 = inlined_call_operand.vmem [shape: f32[2,160,2], index: 1, kind: input, shape index: {}]
  %s2 = inlined_call_operand.vmem [shape: f32[160,40], index: 2, kind: input, shape index: {}]
  %s3 = inlined_call_operand.vmem [shape: f32[160,40], index: 3, kind: input, shape index: {}]
  %s4 = inlined_call_operand.vmem [shape: f32[40,160], index: 4, kind: input, shape index: {}]
  %s5 = inlined_call_operand.vmem [shape: f32[4,64], index: 5, kind: input, shape index: {}]
  %s6 = inlined_call_operand.vmem [shape: f32[4,64], index: 6, kind: input, shape index: {}]
  %s7 = inlined_call_operand.vmem [shape: f32[1,64], index: 7, kind: input, shape index: {}]
  %s8 = inlined_call_operand.vmem [shape: f32[64,64], index: 8, kind: input, shape index: {}]
  %s9 = inlined_call_operand.vmem [shape: f32[1,64], index: 9, kind: input, shape index: {}]
  %s10 = inlined_call_operand.vmem [shape: f32[2,64], index: 10, kind: input, shape index: {}]
  %s11 = inlined_call_operand.vmem [shape: f32[64,32], index: 11, kind: input, shape index: {}]
  %s12 = inlined_call_operand.vmem [shape: f32[4,32], index: 12, kind: input, shape index: {}]
  %s13 = inlined_call_operand.vmem [shape: f32[32,32], index: 13, kind: input, shape index: {}]
  %s14 = inlined_call_operand.vmem [shape: f32[1,32], index: 14, kind: input, shape index: {}]
  %s15 = inlined_call_operand.vmem [shape: f32[32,32], index: 15, kind: input, shape index: {}]
  %s16 = inlined_call_operand.vmem [shape: f32[1,32], index: 16, kind: input, shape index: {}]
  %s17 = inlined_call_operand.vmem [shape: f32[32,4], index: 17, kind: input, shape index: {}]
  %s18 = inlined_call_operand.vmem [shape: f32[1,4], index: 18, kind: input, shape index: {}]
  %s19 = inlined_call_operand.vmem [shape: f32[2,40,4], index: 19, kind: output, shape index: {}]
  %s20 = sld [smem:[#allocation0]]
  $region109: #{mlp_decoder_forward.1} parent=0
    _
  %s22 = ssub.s32 1, %s20
  %s23 = scalar_select 0, %s22, %s20
  loop: start=0, step=1, limit=4
  $region2: #{mlp_decoder_forward.1} parent=0 // loop_pre_header
    _
  $region3: #{mlp_decoder_forward.1} parent=0 // loop_header
    %s25 = sphi 0, %s29
    %p26 = scmp.ge.s32.totalorder %s25, 4
    %s35 = sphi 0, %s37
    %s38 = sphi 0, %s35
    %s39 = sphi 0, %s38
    %s55 = sphi 0, %s39
    %s61 = sphi 0, %s63
    %s64 = sphi 0, %s61
    %s65 = sphi 0, %s64
    %s81 = sphi 0, %s65
    %s85 = sphi 0, %s85
    %s87 = sphi 0, %s85
    %s88 = sphi 0, %s87
    %s102 = sphi 0, %s88
    %s106 = sphi 0, %s106
    %s108 = sphi 0, %s106
    %s109 = sphi 0, %s108
    %s123 = sphi 0, %s109
    %s127 = sphi 0, %s127
    %s129 = sphi 0, %s127
    %s130 = sphi 0, %s129
    %s144 = sphi 0, %s130
    %s148 = sphi 0, %s148
    %s150 = sphi 0, %s148
    %s151 = sphi 0, %s150
    %s165 = sphi 0, %s151
    %s169 = sphi 0, %s169
    %s171 = sphi 0, %s169
    %s172 = sphi 0, %s171
    %s186 = sphi 0, %s172
    %s190 = sphi 0, %s190
    %s192 = sphi 0, %s190
    %s193 = sphi 0, %s192
    %s207 = sphi 0, %s193
    %s211 = sphi 0, %s211
    %s213 = sphi 0, %s211
    %s214 = sphi 0, %s213
    %s228 = sphi 0, %s214
    %s232 = sphi 0, %s232
    %s234 = sphi 0, %s232
    %s235 = sphi 0, %s234
    %s249 = sphi 0, %s235
    %s253 = sphi 0, %s253
    %s255 = sphi 0, %s253
    %s256 = sphi 0, %s255
    %s270 = sphi 0, %s256
    %s274 = sphi 0, %s274
    %s276 = sphi 0, %s274
    %s277 = sphi 0, %s276
    %s291 = sphi 0, %s277
    %s295 = sphi 0, %s295
    %s297 = sphi 0, %s295
    %s298 = sphi 0, %s297
    %s312 = sphi 0, %s298
    %s316 = sphi 0, %s316
    %s318 = sphi 0, %s316
    %s319 = sphi 0, %s318
    %s333 = sphi 0, %s319
    %s337 = sphi 0, %s337
    %s339 = sphi 0, %s337
    %s340 = sphi 0, %s339
    %s354 = sphi 0, %s340
    %s358 = sphi 0, %s358
    %s360 = sphi 0, %s358
    %s361 = sphi 0, %s360
    %s375 = sphi 0, %s361
    %s379 = sphi 0, %s379
    %s381 = sphi 0, %s379
    %s382 = sphi 0, %s381
    %s396 = sphi 0, %s382
    %s400 = sphi 0, %s400
    %s402 = sphi 0, %s400
    %s403 = sphi 0, %s402
    %s417 = sphi 0, %s403
    %s421 = sphi 0, %s421
    %s423 = sphi 0, %s421
    %s424 = sphi 0, %s423
    %s438 = sphi 0, %s424
    %s444 = sphi 0, %s446
    %s447 = sphi 0, %s444
    %s448 = sphi 0, %s447
    %s464 = sphi 0, %s448
  $region4: #{mlp_decoder_forward.1} parent=0 // loop_header_branch
    %28 = sbr.rel (%p26) target = $region8
  $region5: #{mlp_decoder_forward.1} parent=0 // loop_body
    %s30 = ssub.s32 %s25, 1
    %s31 = ssub.s32 %s25, 2
    %s32 = sadd.s32 %s25, 1
    %s33 = ssub.s32 %s25, %s32
    %p34 = scmp.eq.s32.totalorder %s33, 0
    %s36 = sadd.s32 %s35, 1
    %s37 = scalar_select %p34, %s35, %s36
    %p40 = pneg %p34
    %p41 = scmp.eq.s32.totalorder %s25, 1
    %p42 = por %p40, %p41
    %p43 = scmp.ne.s32.totalorder %s35, %s38
    %p44 = scmp.eq.s32.totalorder %s25, 0
    %p45 = por %p43, %p44
    %p46 = scmp.ne.s32.totalorder %s35, %s38
    %p47 = scmp.eq.s32.totalorder %s30, 1
    %p48 = por %p46, %p47
    %p49 = scmp.ne.s32.totalorder %s38, %s39
    %p50 = scmp.eq.s32.totalorder %s30, 0
    %p51 = por %p49, %p50
    %p52 = scmp.ne.s32.totalorder %s38, %s39
    %p53 = scmp.eq.s32.totalorder %s31, 1
    %p54 = por %p52, %p53
    %p56 = scmp.ne.s32.totalorder %s39, %s55
    %p57 = scmp.eq.s32.totalorder %s31, 0
    %p58 = por %p56, %p57
    %s59 = ssub.s32 %s25, %s32
    %p60 = scmp.eq.s32.totalorder %s59, 0
    %s62 = sadd.s32 %s61, 1
    %s63 = scalar_select %p60, %s61, %s62
    %p66 = pneg %p60
    %p67 = scmp.eq.s32.totalorder %s25, 1
    %p68 = por %p66, %p67
    %p69 = scmp.ne.s32.totalorder %s61, %s64
    %p70 = scmp.eq.s32.totalorder %s25, 0
    %p71 = por %p69, %p70
    %p72 = scmp.ne.s32.totalorder %s61, %s64
    %p73 = scmp.eq.s32.totalorder %s30, 1
    %p74 = por %p72, %p73
    %p75 = scmp.ne.s32.totalorder %s64, %s65
    %p76 = scmp.eq.s32.totalorder %s30, 0
    %p77 = por %p75, %p76
    %p78 = scmp.ne.s32.totalorder %s64, %s65
    %p79 = scmp.eq.s32.totalorder %s31, 1
    %p80 = por %p78, %p79
    %p82 = scmp.ne.s32.totalorder %s65, %s81
    %p83 = scmp.eq.s32.totalorder %s31, 0
    %p84 = por %p82, %p83
    %s86 = sadd.s32 %s85, 1
    %p89 = scmp.eq.s32.totalorder %s25, 1
    %p90 = scmp.ne.s32.totalorder %s85, %s87
    %p91 = scmp.eq.s32.totalorder %s25, 0
    %p92 = por %p90, %p91
    %p93 = scmp.ne.s32.totalorder %s85, %s87
    %p94 = scmp.eq.s32.totalorder %s30, 1
    %p95 = por %p93, %p94
    %p96 = scmp.ne.s32.totalorder %s87, %s88
    %p97 = scmp.eq.s32.totalorder %s30, 0
    %p98 = por %p96, %p97
    %p99 = scmp.ne.s32.totalorder %s87, %s88
    %p100 = scmp.eq.s32.totalorder %s31, 1
    %p101 = por %p99, %p100
    %p103 = scmp.ne.s32.totalorder %s88, %s102
    %p104 = scmp.eq.s32.totalorder %s31, 0
    %p105 = por %p103, %p104
    %s107 = sadd.s32 %s106, 1
    %p110 = scmp.eq.s32.totalorder %s25, 1
    %p111 = scmp.ne.s32.totalorder %s106, %s108
    %p112 = scmp.eq.s32.totalorder %s25, 0
    %p113 = por %p111, %p112
    %p114 = scmp.ne.s32.totalorder %s106, %s108
    %p115 = scmp.eq.s32.totalorder %s30, 1
    %p116 = por %p114, %p115
    %p117 = scmp.ne.s32.totalorder %s108, %s109
    %p118 = scmp.eq.s32.totalorder %s30, 0
    %p119 = por %p117, %p118
    %p120 = scmp.ne.s32.totalorder %s108, %s109
    %p121 = scmp.eq.s32.totalorder %s31, 1
    %p122 = por %p120, %p121
    %p124 = scmp.ne.s32.totalorder %s109, %s123
    %p125 = scmp.eq.s32.totalorder %s31, 0
    %p126 = por %p124, %p125
    %s128 = sadd.s32 %s127, 1
    %p131 = scmp.eq.s32.totalorder %s25, 1
    %p132 = scmp.ne.s32.totalorder %s127, %s129
    %p133 = scmp.eq.s32.totalorder %s25, 0
    %p134 = por %p132, %p133
    %p135 = scmp.ne.s32.totalorder %s127, %s129
    %p136 = scmp.eq.s32.totalorder %s30, 1
    %p137 = por %p135, %p136
    %p138 = scmp.ne.s32.totalorder %s129, %s130
    %p139 = scmp.eq.s32.totalorder %s30, 0
    %p140 = por %p138, %p139
    %p141 = scmp.ne.s32.totalorder %s129, %s130
    %p142 = scmp.eq.s32.totalorder %s31, 1
    %p143 = por %p141, %p142
    %p145 = scmp.ne.s32.totalorder %s130, %s144
    %p146 = scmp.eq.s32.totalorder %s31, 0
    %p147 = por %p145, %p146
    %s149 = sadd.s32 %s148, 1
    %p152 = scmp.eq.s32.totalorder %s25, 1
    %p153 = scmp.ne.s32.totalorder %s148, %s150
    %p154 = scmp.eq.s32.totalorder %s25, 0
    %p155 = por %p153, %p154
    %p156 = scmp.ne.s32.totalorder %s148, %s150
    %p157 = scmp.eq.s32.totalorder %s30, 1
    %p158 = por %p156, %p157
    %p159 = scmp.ne.s32.totalorder %s150, %s151
    %p160 = scmp.eq.s32.totalorder %s30, 0
    %p161 = por %p159, %p160
    %p162 = scmp.ne.s32.totalorder %s150, %s151
    %p163 = scmp.eq.s32.totalorder %s31, 1
    %p164 = por %p162, %p163
    %p166 = scmp.ne.s32.totalorder %s151, %s165
    %p167 = scmp.eq.s32.totalorder %s31, 0
    %p168 = por %p166, %p167
    %s170 = sadd.s32 %s169, 1
    %p173 = scmp.eq.s32.totalorder %s25, 1
    %p174 = scmp.ne.s32.totalorder %s169, %s171
    %p175 = scmp.eq.s32.totalorder %s25, 0
    %p176 = por %p174, %p175
    %p177 = scmp.ne.s32.totalorder %s169, %s171
    %p178 = scmp.eq.s32.totalorder %s30, 1
    %p179 = por %p177, %p178
    %p180 = scmp.ne.s32.totalorder %s171, %s172
    %p181 = scmp.eq.s32.totalorder %s30, 0
    %p182 = por %p180, %p181
    %p183 = scmp.ne.s32.totalorder %s171, %s172
    %p184 = scmp.eq.s32.totalorder %s31, 1
    %p185 = por %p183, %p184
    %p187 = scmp.ne.s32.totalorder %s172, %s186
    %p188 = scmp.eq.s32.totalorder %s31, 0
    %p189 = por %p187, %p188
    %s191 = sadd.s32 %s190, 1
    %p194 = scmp.eq.s32.totalorder %s25, 1
    %p195 = scmp.ne.s32.totalorder %s190, %s192
    %p196 = scmp.eq.s32.totalorder %s25, 0
    %p197 = por %p195, %p196
    %p198 = scmp.ne.s32.totalorder %s190, %s192
    %p199 = scmp.eq.s32.totalorder %s30, 1
    %p200 = por %p198, %p199
    %p201 = scmp.ne.s32.totalorder %s192, %s193
    %p202 = scmp.eq.s32.totalorder %s30, 0
    %p203 = por %p201, %p202
    %p204 = scmp.ne.s32.totalorder %s192, %s193
    %p205 = scmp.eq.s32.totalorder %s31, 1
    %p206 = por %p204, %p205
    %p208 = scmp.ne.s32.totalorder %s193, %s207
    %p209 = scmp.eq.s32.totalorder %s31, 0
    %p210 = por %p208, %p209
    %s212 = sadd.s32 %s211, 1
    %p215 = scmp.eq.s32.totalorder %s25, 1
    %p216 = scmp.ne.s32.totalorder %s211, %s213
    %p217 = scmp.eq.s32.totalorder %s25, 0
    %p218 = por %p216, %p217
    %p219 = scmp.ne.s32.totalorder %s211, %s213
    %p220 = scmp.eq.s32.totalorder %s30, 1
    %p221 = por %p219, %p220
    %p222 = scmp.ne.s32.totalorder %s213, %s214
    %p223 = scmp.eq.s32.totalorder %s30, 0
    %p224 = por %p222, %p223
    %p225 = scmp.ne.s32.totalorder %s213, %s214
    %p226 = scmp.eq.s32.totalorder %s31, 1
    %p227 = por %p225, %p226
    %p229 = scmp.ne.s32.totalorder %s214, %s228
    %p230 = scmp.eq.s32.totalorder %s31, 0
    %p231 = por %p229, %p230
    %s233 = sadd.s32 %s232, 1
    %p236 = scmp.eq.s32.totalorder %s25, 1
    %p237 = scmp.ne.s32.totalorder %s232, %s234
    %p238 = scmp.eq.s32.totalorder %s25, 0
    %p239 = por %p237, %p238
    %p240 = scmp.ne.s32.totalorder %s232, %s234
    %p241 = scmp.eq.s32.totalorder %s30, 1
    %p242 = por %p240, %p241
    %p243 = scmp.ne.s32.totalorder %s234, %s235
    %p244 = scmp.eq.s32.totalorder %s30, 0
    %p245 = por %p243, %p244
    %p246 = scmp.ne.s32.totalorder %s234, %s235
    %p247 = scmp.eq.s32.totalorder %s31, 1
    %p248 = por %p246, %p247
    %p250 = scmp.ne.s32.totalorder %s235, %s249
    %p251 = scmp.eq.s32.totalorder %s31, 0
    %p252 = por %p250, %p251
    %s254 = sadd.s32 %s253, 1
    %p257 = scmp.eq.s32.totalorder %s25, 1
    %p258 = scmp.ne.s32.totalorder %s253, %s255
    %p259 = scmp.eq.s32.totalorder %s25, 0
    %p260 = por %p258, %p259
    %p261 = scmp.ne.s32.totalorder %s253, %s255
    %p262 = scmp.eq.s32.totalorder %s30, 1
    %p263 = por %p261, %p262
    %p264 = scmp.ne.s32.totalorder %s255, %s256
    %p265 = scmp.eq.s32.totalorder %s30, 0
    %p266 = por %p264, %p265
    %p267 = scmp.ne.s32.totalorder %s255, %s256
    %p268 = scmp.eq.s32.totalorder %s31, 1
    %p269 = por %p267, %p268
    %p271 = scmp.ne.s32.totalorder %s256, %s270
    %p272 = scmp.eq.s32.totalorder %s31, 0
    %p273 = por %p271, %p272
    %s275 = sadd.s32 %s274, 1
    %p278 = scmp.eq.s32.totalorder %s25, 1
    %p279 = scmp.ne.s32.totalorder %s274, %s276
    %p280 = scmp.eq.s32.totalorder %s25, 0
    %p281 = por %p279, %p280
    %p282 = scmp.ne.s32.totalorder %s274, %s276
    %p283 = scmp.eq.s32.totalorder %s30, 1
    %p284 = por %p282, %p283
    %p285 = scmp.ne.s32.totalorder %s276, %s277
    %p286 = scmp.eq.s32.totalorder %s30, 0
    %p287 = por %p285, %p286
    %p288 = scmp.ne.s32.totalorder %s276, %s277
    %p289 = scmp.eq.s32.totalorder %s31, 1
    %p290 = por %p288, %p289
    %p292 = scmp.ne.s32.totalorder %s277, %s291
    %p293 = scmp.eq.s32.totalorder %s31, 0
    %p294 = por %p292, %p293
    %s296 = sadd.s32 %s295, 1
    %p299 = scmp.eq.s32.totalorder %s25, 1
    %p300 = scmp.ne.s32.totalorder %s295, %s297
    %p301 = scmp.eq.s32.totalorder %s25, 0
    %p302 = por %p300, %p301
    %p303 = scmp.ne.s32.totalorder %s295, %s297
    %p304 = scmp.eq.s32.totalorder %s30, 1
    %p305 = por %p303, %p304
    %p306 = scmp.ne.s32.totalorder %s297, %s298
    %p307 = scmp.eq.s32.totalorder %s30, 0
    %p308 = por %p306, %p307
    %p309 = scmp.ne.s32.totalorder %s297, %s298
    %p310 = scmp.eq.s32.totalorder %s31, 1
    %p311 = por %p309, %p310
    %p313 = scmp.ne.s32.totalorder %s298, %s312
    %p314 = scmp.eq.s32.totalorder %s31, 0
    %p315 = por %p313, %p314
    %s317 = sadd.s32 %s316, 1
    %p320 = scmp.eq.s32.totalorder %s25, 1
    %p321 = scmp.ne.s32.totalorder %s316, %s318
    %p322 = scmp.eq.s32.totalorder %s25, 0
    %p323 = por %p321, %p322
    %p324 = scmp.ne.s32.totalorder %s316, %s318
    %p325 = scmp.eq.s32.totalorder %s30, 1
    %p326 = por %p324, %p325
    %p327 = scmp.ne.s32.totalorder %s318, %s319
    %p328 = scmp.eq.s32.totalorder %s30, 0
    %p329 = por %p327, %p328
    %p330 = scmp.ne.s32.totalorder %s318, %s319
    %p331 = scmp.eq.s32.totalorder %s31, 1
    %p332 = por %p330, %p331
    %p334 = scmp.ne.s32.totalorder %s319, %s333
    %p335 = scmp.eq.s32.totalorder %s31, 0
    %p336 = por %p334, %p335
    %s338 = sadd.s32 %s337, 1
    %p341 = scmp.eq.s32.totalorder %s25, 1
    %p342 = scmp.ne.s32.totalorder %s337, %s339
    %p343 = scmp.eq.s32.totalorder %s25, 0
    %p344 = por %p342, %p343
    %p345 = scmp.ne.s32.totalorder %s337, %s339
    %p346 = scmp.eq.s32.totalorder %s30, 1
    %p347 = por %p345, %p346
    %p348 = scmp.ne.s32.totalorder %s339, %s340
    %p349 = scmp.eq.s32.totalorder %s30, 0
    %p350 = por %p348, %p349
    %p351 = scmp.ne.s32.totalorder %s339, %s340
    %p352 = scmp.eq.s32.totalorder %s31, 1
    %p353 = por %p351, %p352
    %p355 = scmp.ne.s32.totalorder %s340, %s354
    %p356 = scmp.eq.s32.totalorder %s31, 0
    %p357 = por %p355, %p356
    %s359 = sadd.s32 %s358, 1
    %p362 = scmp.eq.s32.totalorder %s25, 1
    %p363 = scmp.ne.s32.totalorder %s358, %s360
    %p364 = scmp.eq.s32.totalorder %s25, 0
    %p365 = por %p363, %p364
    %p366 = scmp.ne.s32.totalorder %s358, %s360
    %p367 = scmp.eq.s32.totalorder %s30, 1
    %p368 = por %p366, %p367
    %p369 = scmp.ne.s32.totalorder %s360, %s361
    %p370 = scmp.eq.s32.totalorder %s30, 0
    %p371 = por %p369, %p370
    %p372 = scmp.ne.s32.totalorder %s360, %s361
    %p373 = scmp.eq.s32.totalorder %s31, 1
    %p374 = por %p372, %p373
    %p376 = scmp.ne.s32.totalorder %s361, %s375
    %p377 = scmp.eq.s32.totalorder %s31, 0
    %p378 = por %p376, %p377
    %s380 = sadd.s32 %s379, 1
    %p383 = scmp.eq.s32.totalorder %s25, 1
    %p384 = scmp.ne.s32.totalorder %s379, %s381
    %p385 = scmp.eq.s32.totalorder %s25, 0
    %p386 = por %p384, %p385
    %p387 = scmp.ne.s32.totalorder %s379, %s381
    %p388 = scmp.eq.s32.totalorder %s30, 1
    %p389 = por %p387, %p388
    %p390 = scmp.ne.s32.totalorder %s381, %s382
    %p391 = scmp.eq.s32.totalorder %s30, 0
    %p392 = por %p390, %p391
    %p393 = scmp.ne.s32.totalorder %s381, %s382
    %p394 = scmp.eq.s32.totalorder %s31, 1
    %p395 = por %p393, %p394
    %p397 = scmp.ne.s32.totalorder %s382, %s396
    %p398 = scmp.eq.s32.totalorder %s31, 0
    %p399 = por %p397, %p398
    %s401 = sadd.s32 %s400, 1
    %p404 = scmp.eq.s32.totalorder %s25, 1
    %p405 = scmp.ne.s32.totalorder %s400, %s402
    %p406 = scmp.eq.s32.totalorder %s25, 0
    %p407 = por %p405, %p406
    %p408 = scmp.ne.s32.totalorder %s400, %s402
    %p409 = scmp.eq.s32.totalorder %s30, 1
    %p410 = por %p408, %p409
    %p411 = scmp.ne.s32.totalorder %s402, %s403
    %p412 = scmp.eq.s32.totalorder %s30, 0
    %p413 = por %p411, %p412
    %p414 = scmp.ne.s32.totalorder %s402, %s403
    %p415 = scmp.eq.s32.totalorder %s31, 1
    %p416 = por %p414, %p415
    %p418 = scmp.ne.s32.totalorder %s403, %s417
    %p419 = scmp.eq.s32.totalorder %s31, 0
    %p420 = por %p418, %p419
    %s422 = sadd.s32 %s421, 1
    %p425 = scmp.eq.s32.totalorder %s25, 1
    %p426 = scmp.ne.s32.totalorder %s421, %s423
    %p427 = scmp.eq.s32.totalorder %s25, 0
    %p428 = por %p426, %p427
    %p429 = scmp.ne.s32.totalorder %s421, %s423
    %p430 = scmp.eq.s32.totalorder %s30, 1
    %p431 = por %p429, %p430
    %p432 = scmp.ne.s32.totalorder %s423, %s424
    %p433 = scmp.eq.s32.totalorder %s30, 0
    %p434 = por %p432, %p433
    %p435 = scmp.ne.s32.totalorder %s423, %s424
    %p436 = scmp.eq.s32.totalorder %s31, 1
    %p437 = por %p435, %p436
    %p439 = scmp.ne.s32.totalorder %s424, %s438
    %p440 = scmp.eq.s32.totalorder %s31, 0
    %p441 = por %p439, %p440
    %s442 = ssub.s32 %s25, %s32
    %p443 = scmp.eq.s32.totalorder %s442, 0
    %s445 = sadd.s32 %s444, 1
    %s446 = scalar_select %p443, %s444, %s445
    %p449 = pneg %p443
    %p450 = scmp.eq.s32.totalorder %s25, 1
    %p451 = por %p449, %p450
    %p452 = scmp.ne.s32.totalorder %s444, %s447
    %p453 = scmp.eq.s32.totalorder %s25, 0
    %p454 = por %p452, %p453
    %p455 = scmp.ne.s32.totalorder %s444, %s447
    %p456 = scmp.eq.s32.totalorder %s30, 1
    %p457 = por %p455, %p456
    %p458 = scmp.ne.s32.totalorder %s447, %s448
    %p459 = scmp.eq.s32.totalorder %s30, 0
    %p460 = por %p458, %p459
    %p461 = scmp.ne.s32.totalorder %s447, %s448
    %p462 = scmp.eq.s32.totalorder %s31, 1
    %p463 = por %p461, %p462
    %p465 = scmp.ne.s32.totalorder %s448, %s464
    %p466 = scmp.eq.s32.totalorder %s31, 0
    %p467 = por %p465, %p466
    %p468 = scmp.le.s32.totalorder 1, %s25
    %p469 = scmp.lt.s32.totalorder %s25, 3
    %p470 = pnand %p468, %p469
    %p471 = pneg %p470
    // Predicated region
    $region9: #{mlp_decoder_forward.1} parent=5 // pred_check
      _
    $region10: #{mlp_decoder_forward.1} parent=5 // pred_check_branch
      %473 = sbr.rel (%p470) target = $region12
    $region11: #{mlp_decoder_forward.1} parent=5 // pred_region
      %s474 = ssub.s32 %s25, 1
      // Predicated region
      $region13: #{mlp_decoder_forward.1} parent=11 // pred_check
        %p475 = pneg %p98
      $region14: #{mlp_decoder_forward.1} parent=11 // pred_check_branch
        %477 = sbr.rel (%p475) target = $region16
      $region15: #{mlp_decoder_forward.1} parent=11 // pred_region
        _
      $region16: #{mlp_decoder_forward.1} parent=11 // pred_fallthru
        _
      // Predicated region
      $region17: #{mlp_decoder_forward.1} parent=11 // pred_check
        %p478 = pneg %p119
      $region18: #{mlp_decoder_forward.1} parent=11 // pred_check_branch
        %480 = sbr.rel (%p478) target = $region20
      $region19: #{mlp_decoder_forward.1} parent=11 // pred_region
        _
      $region20: #{mlp_decoder_forward.1} parent=11 // pred_fallthru
        _
      // Predicated region
      $region21: #{mlp_decoder_forward.1} parent=11 // pred_check
        %p481 = pneg %p140
      $region22: #{mlp_decoder_forward.1} parent=11 // pred_check_branch
        %483 = sbr.rel (%p481) target = $region24
      $region23: #{mlp_decoder_forward.1} parent=11 // pred_region
        _
      $region24: #{mlp_decoder_forward.1} parent=11 // pred_fallthru
        _
      // Predicated region
      $region25: #{mlp_decoder_forward.1} parent=11 // pred_check
        %p484 = pneg %p161
      $region26: #{mlp_decoder_forward.1} parent=11 // pred_check_branch
        %486 = sbr.rel (%p484) target = $region28
      $region27: #{mlp_decoder_forward.1} parent=11 // pred_region
        _
      $region28: #{mlp_decoder_forward.1} parent=11 // pred_fallthru
        _
      // Predicated region
      $region29: #{mlp_decoder_forward.1} parent=11 // pred_check
        %p487 = pneg %p182
      $region30: #{mlp_decoder_forward.1} parent=11 // pred_check_branch
        %489 = sbr.rel (%p487) target = $region32
      $region31: #{mlp_decoder_forward.1} parent=11 // pred_region
        _
      $region32: #{mlp_decoder_forward.1} parent=11 // pred_fallthru
        _
      // Predicated region
      $region33: #{mlp_decoder_forward.1} parent=11 // pred_check
        %p490 = pneg %p203
      $region34: #{mlp_decoder_forward.1} parent=11 // pred_check_branch
        %492 = sbr.rel (%p490) target = $region36
      $region35: #{mlp_decoder_forward.1} parent=11 // pred_region
        _
      $region36: #{mlp_decoder_forward.1} parent=11 // pred_fallthru
        _
      // Predicated region
      $region37: #{mlp_decoder_forward.1} parent=11 // pred_check
        %p493 = pneg %p224
      $region38: #{mlp_decoder_forward.1} parent=11 // pred_check_branch
        %495 = sbr.rel (%p493) target = $region40
      $region39: #{mlp_decoder_forward.1} parent=11 // pred_region
        _
      $region40: #{mlp_decoder_forward.1} parent=11 // pred_fallthru
        _
      // Predicated region
      $region41: #{mlp_decoder_forward.1} parent=11 // pred_check
        %p496 = pneg %p245
      $region42: #{mlp_decoder_forward.1} parent=11 // pred_check_branch
        %498 = sbr.rel (%p496) target = $region44
      $region43: #{mlp_decoder_forward.1} parent=11 // pred_region
        _
      $region44: #{mlp_decoder_forward.1} parent=11 // pred_fallthru
        _
      // Predicated region
      $region45: #{mlp_decoder_forward.1} parent=11 // pred_check
        %p499 = pneg %p266
      $region46: #{mlp_decoder_forward.1} parent=11 // pred_check_branch
        %501 = sbr.rel (%p499) target = $region48
      $region47: #{mlp_decoder_forward.1} parent=11 // pred_region
        _
      $region48: #{mlp_decoder_forward.1} parent=11 // pred_fallthru
        _
      // Predicated region
      $region49: #{mlp_decoder_forward.1} parent=11 // pred_check
        %p502 = pneg %p287
      $region50: #{mlp_decoder_forward.1} parent=11 // pred_check_branch
        %504 = sbr.rel (%p502) target = $region52
      $region51: #{mlp_decoder_forward.1} parent=11 // pred_region
        _
      $region52: #{mlp_decoder_forward.1} parent=11 // pred_fallthru
        _
      // Predicated region
      $region53: #{mlp_decoder_forward.1} parent=11 // pred_check
        %p505 = pneg %p308
      $region54: #{mlp_decoder_forward.1} parent=11 // pred_check_branch
        %507 = sbr.rel (%p505) target = $region56
      $region55: #{mlp_decoder_forward.1} parent=11 // pred_region
        _
      $region56: #{mlp_decoder_forward.1} parent=11 // pred_fallthru
        _
      // Predicated region
      $region57: #{mlp_decoder_forward.1} parent=11 // pred_check
        %p508 = pneg %p329
      $region58: #{mlp_decoder_forward.1} parent=11 // pred_check_branch
        %510 = sbr.rel (%p508) target = $region60
      $region59: #{mlp_decoder_forward.1} parent=11 // pred_region
        _
      $region60: #{mlp_decoder_forward.1} parent=11 // pred_fallthru
        _
      // Predicated region
      $region61: #{mlp_decoder_forward.1} parent=11 // pred_check
        %p511 = pneg %p350
      $region62: #{mlp_decoder_forward.1} parent=11 // pred_check_branch
        %513 = sbr.rel (%p511) target = $region64
      $region63: #{mlp_decoder_forward.1} parent=11 // pred_region
        _
      $region64: #{mlp_decoder_forward.1} parent=11 // pred_fallthru
        _
      // Predicated region
      $region65: #{mlp_decoder_forward.1} parent=11 // pred_check
        %p514 = pneg %p371
      $region66: #{mlp_decoder_forward.1} parent=11 // pred_check_branch
        %516 = sbr.rel (%p514) target = $region68
      $region67: #{mlp_decoder_forward.1} parent=11 // pred_region
        _
      $region68: #{mlp_decoder_forward.1} parent=11 // pred_fallthru
        _
      // Predicated region
      $region69: #{mlp_decoder_forward.1} parent=11 // pred_check
        %p517 = pneg %p392
      $region70: #{mlp_decoder_forward.1} parent=11 // pred_check_branch
        %519 = sbr.rel (%p517) target = $region72
      $region71: #{mlp_decoder_forward.1} parent=11 // pred_region
        _
      $region72: #{mlp_decoder_forward.1} parent=11 // pred_fallthru
        _
      // Predicated region
      $region73: #{mlp_decoder_forward.1} parent=11 // pred_check
        %p520 = pneg %p413
      $region74: #{mlp_decoder_forward.1} parent=11 // pred_check_branch
        %522 = sbr.rel (%p520) target = $region76
      $region75: #{mlp_decoder_forward.1} parent=11 // pred_region
        _
      $region76: #{mlp_decoder_forward.1} parent=11 // pred_fallthru
        _
      // Predicated region
      $region77: #{mlp_decoder_forward.1} parent=11 // pred_check
        %p523 = pneg %p434
      $region78: #{mlp_decoder_forward.1} parent=11 // pred_check_branch
        %525 = sbr.rel (%p523) target = $region80
      $region79: #{mlp_decoder_forward.1} parent=11 // pred_region
        _
      $region80: #{mlp_decoder_forward.1} parent=11 // pred_fallthru
        _
    $region12: #{mlp_decoder_forward.1} parent=5 // pred_fallthru
      _
    %p526 = scmp.lt.s32.totalorder %s25, 2
    // Predicated region
    $region81: #{mlp_decoder_forward.1} parent=5 // pred_check
      %p527 = pneg %p526
    $region82: #{mlp_decoder_forward.1} parent=5 // pred_check_branch
      %529 = sbr.rel (%p527) target = $region84
    $region83: #{mlp_decoder_forward.1} parent=5 // pred_region
      // Predicated region
      $region85: #{mlp_decoder_forward.1} parent=83 // pred_check
        %p530 = pneg %p45
      $region86: #{mlp_decoder_forward.1} parent=83 // pred_check_branch
        %532 = sbr.rel (%p530) target = $region88
      $region87: #{mlp_decoder_forward.1} parent=83 // pred_region
        %p533 = scmp.lt.s32.totalorder %s25, 1
        %s534 = scalar_select %p533, %s25, 1
        %s535 = smul.addr %s534, 5
        %s536 = smul.addr %s535, 8
        %s537 = scalar_lea.vmem %s0, %s536
      $region88: #{mlp_decoder_forward.1} parent=83 // pred_fallthru
        _
      // Predicated region
      $region89: #{mlp_decoder_forward.1} parent=83 // pred_check
        %p538 = pneg %p71
      $region90: #{mlp_decoder_forward.1} parent=83 // pred_check_branch
        %540 = sbr.rel (%p538) target = $region92
      $region91: #{mlp_decoder_forward.1} parent=83 // pred_region
        %p541 = scmp.lt.s32.totalorder %s25, 1
        %s542 = scalar_select %p541, %s25, 1
        %s543 = smul.addr %s542, 20
        %s544 = smul.addr %s543, 8
        %s545 = scalar_lea.vmem %s1, %s544
      $region92: #{mlp_decoder_forward.1} parent=83 // pred_fallthru
        _
    $region84: #{mlp_decoder_forward.1} parent=5 // pred_fallthru
      _
    %p546 = scmp.le.s32.totalorder 1, %s25
    %p547 = scmp.lt.s32.totalorder %s25, 3
    %p548 = pnand %p546, %p547
    %p549 = pneg %p548
    // Predicated region
    $region93: #{mlp_decoder_forward.1} parent=5 // pred_check
      _
    $region94: #{mlp_decoder_forward.1} parent=5 // pred_check_branch
      %551 = sbr.rel (%p548) target = $region96
    $region95: #{mlp_decoder_forward.1} parent=5 // pred_region
      %s552 = ssub.s32 %s25, 1
      %p553 = scmp.lt.s32.totalorder %s30, 1
      %s554 = scalar_select %p553, %s30, 1
      %s555 = smul.addr %s554, 5
      %s556 = smul.addr %s555, 8
      %s557 = scalar_lea.vmem %s0, %s556
      %p558 = pneg %p51
      %p559 = pneg %p48
      %p560 = scmp.lt.s32.totalorder %s30, 1
      %s561 = scalar_select %p560, %s30, 1
      %s562 = smul.addr %s561, 20
      %s563 = smul.addr %s562, 8
      %s564 = scalar_lea.vmem %s1, %s563
      %p565 = pneg %p77
      %p566 = pneg %p74
      %p567 = pneg %p98
      %p568 = pneg %p95
      %p569 = pneg %p119
      %p570 = pneg %p116
      %p571 = pneg %p140
      %p572 = pneg %p137
      %p573 = pneg %p161
      %p574 = pneg %p158
      %p575 = pneg %p182
      %p576 = pneg %p179
      %p577 = pneg %p203
      %p578 = pneg %p200
      %p579 = pneg %p224
      %p580 = pneg %p221
      %p581 = pneg %p245
      %p582 = pneg %p242
      %p583 = pneg %p266
      %p584 = pneg %p263
      %p585 = pneg %p287
      %p586 = pneg %p284
      %p587 = pneg %p308
      %p588 = pneg %p305
      %p589 = pneg %p329
      %p590 = pneg %p326
      %p591 = pneg %p350
      %p592 = pneg %p347
      %p593 = pneg %p371
      %p594 = pneg %p368
      %p595 = pneg %p392
      %p596 = pneg %p389
      %p597 = pneg %p413
      %p598 = pneg %p410
      %p599 = pneg %p434
      %p600 = pneg %p431
      %p601 = pneg %p460
      %p602 = pneg %p457
      %p603 = scmp.lt.s32.totalorder %s30, 1
      %s604 = scalar_select %p603, %s30, 1
      %s605 = smul.addr %s604, 5
      %s606 = smul.addr %s605, 8
      %s607 = scalar_lea.vmem %s19, %s606
      %p608 = scmp.lt.s32.totalorder %s30, 1
      %s609 = scalar_select %p608, %s30, 1
      %s610 = smul.addr %s609, 5
      %s611 = smul.addr %s610, 8
      %s612 = scalar_lea.vmem %s0, %s611
      %p613 = scmp.lt.s32.totalorder %s30, 1
      %s614 = scalar_select %p613, %s30, 1
      %s615 = smul.addr %s614, 20
      %s616 = smul.addr %s615, 8
      %s617 = scalar_lea.vmem %s1, %s616
      %p618 = scmp.lt.s32.totalorder %s30, 1
      %s619 = scalar_select %p618, %s30, 1
      %s620 = smul.addr %s619, 5
      %s621 = smul.addr %s620, 8
      %s622 = scalar_lea.vmem %s19, %s621
      %v623 = vld [vmem:[%s612] sm:$0xff]
      %v624 = vld [vmem:[%s612 + $0x8] sm:$0xff]
      %v625 = vld [vmem:[%s612 + $0x10] sm:$0xff]
      %v626 = vld [vmem:[%s612 + $0x18] sm:$0xff]
      %v627 = vld [vmem:[%s612 + $0x20] sm:$0xff]
      %v628 = vld [vmem:[%s617] sm:$0xff]
      %v629 = vld [vmem:[%s617 + $0x8] sm:$0xff]
      %v630 = vld [vmem:[%s617 + $0x10] sm:$0xff]
      %v631 = vld [vmem:[%s617 + $0x18] sm:$0xff]
      %v632 = vld [vmem:[%s617 + $0x20] sm:$0xff]
      %v633 = vld [vmem:[%s617 + $0x28] sm:$0xff]
      %v634 = vld [vmem:[%s617 + $0x30] sm:$0xff]
      %v635 = vld [vmem:[%s617 + $0x38] sm:$0xff]
      %v636 = vld [vmem:[%s617 + $0x40] sm:$0xff]
      %v637 = vld [vmem:[%s617 + $0x48] sm:$0xff]
      %v638 = vld [vmem:[%s617 + $0x50] sm:$0xff]
      %v639 = vld [vmem:[%s617 + $0x58] sm:$0xff]
      %v640 = vld [vmem:[%s617 + $0x60] sm:$0xff]
      %v641 = vld [vmem:[%s617 + $0x68] sm:$0xff]
      %v642 = vld [vmem:[%s617 + $0x70] sm:$0xff]
      %v643 = vld [vmem:[%s617 + $0x78] sm:$0xff]
      %v644 = vld [vmem:[%s617 + $0x80] sm:$0xff]
      %v645 = vld [vmem:[%s617 + $0x88] sm:$0xff]
      %v646 = vld [vmem:[%s617 + $0x90] sm:$0xff]
      %v647 = vld [vmem:[%s617 + $0x98] sm:$0xff]
      %v648 = vld [vmem:[%s2] sm:$0xff]
      %v649 = vld [vmem:[%s2 + $0x8] sm:$0xff]
      %v650 = vld [vmem:[%s2 + $0x10] sm:$0xff]
      %v651 = vld [vmem:[%s2 + $0x18] sm:$0xff]
      %v652 = vld [vmem:[%s2 + $0x20] sm:$0xff]
      %v653 = vld [vmem:[%s2 + $0x28] sm:$0xff]
      %v654 = vld [vmem:[%s2 + $0x30] sm:$0xff]
      %v655 = vld [vmem:[%s2 + $0x38] sm:$0xff]
      %v656 = vld [vmem:[%s2 + $0x40] sm:$0xff]
      %v657 = vld [vmem:[%s2 + $0x48] sm:$0xff]
      %v658 = vld [vmem:[%s2 + $0x50] sm:$0xff]
      %v659 = vld [vmem:[%s2 + $0x58] sm:$0xff]
      %v660 = vld [vmem:[%s2 + $0x60] sm:$0xff]
      %v661 = vld [vmem:[%s2 + $0x68] sm:$0xff]
      %v662 = vld [vmem:[%s2 + $0x70] sm:$0xff]
      %v663 = vld [vmem:[%s2 + $0x78] sm:$0xff]
      %v664 = vld [vmem:[%s2 + $0x80] sm:$0xff]
      %v665 = vld [vmem:[%s2 + $0x88] sm:$0xff]
      %v666 = vld [vmem:[%s2 + $0x90] sm:$0xff]
      %v667 = vld [vmem:[%s2 + $0x98] sm:$0xff]
      %vm668 = vcmask 326656
      %v670 = vsel %vm668, %v648, 0
      %v673 = vsel %vm668, %v649, 0
      %v676 = vsel %vm668, %v650, 0
      %v679 = vsel %vm668, %v651, 0
      %v682 = vsel %vm668, %v652, 0
      %v685 = vsel %vm668, %v653, 0
      %v688 = vsel %vm668, %v654, 0
      %v691 = vsel %vm668, %v655, 0
      %v694 = vsel %vm668, %v656, 0
      %v697 = vsel %vm668, %v657, 0
      %v700 = vsel %vm668, %v658, 0
      %v703 = vsel %vm668, %v659, 0
      %v706 = vsel %vm668, %v660, 0
      %v709 = vsel %vm668, %v661, 0
      %v712 = vsel %vm668, %v662, 0
      %v715 = vsel %vm668, %v663, 0
      %v718 = vsel %vm668, %v664, 0
      %v721 = vsel %vm668, %v665, 0
      %v724 = vsel %vm668, %v666, 0
      %v727 = vsel %vm668, %v667, 0
      %729 = vmatprep.subr.mxu0 0.0
      %730 = vmatpush1.msra.mxu0 0.0
      %731 = vmatprep.subr.mxu0 0.0
      %732 = vmatpush1.msra.mxu0 0.0
      %733 = vmatprep.subr.mxu0 0.0
      %734 = vmatpush1.msra.mxu0 0.0
      %735 = vmatprep.subr.mxu0 0.0
      %736 = vmatpush1.msra.mxu0 0.0
      %737 = vmatprep.subr.mxu0 0.0
      %738 = vmatpush1.msra.mxu0 0.0
      %739 = vmatprep.subr.mxu0 0.0
      %740 = vmatpush1.msra.mxu0 0.0
      %741 = vmatprep.subr.mxu0 0.0
      %742 = vmatpush1.msra.mxu0 0.0
      %743 = vmatprep.subr.mxu0 0.0
      %744 = vmatpush1.msra.mxu0 0.0
      %745 = vmatprep.subr.mxu0 0.0
      %746 = vmatpush1.msra.mxu0 0.0
      %747 = vmatprep.subr.mxu0 0.0
      %748 = vmatpush1.msra.mxu0 0.0
      %749 = vmatprep.subr.mxu0 0.0
      %750 = vmatpush1.msra.mxu0 0.0
      %751 = vmatprep.subr.mxu0 0.0
      %752 = vmatpush1.msra.mxu0 %v627
      %753 = vmatprep.subr.mxu0 0.0
      %754 = vmatpush1.msra.mxu0 %v626
      %755 = vmatprep.subr.mxu0 0.0
      %756 = vmatpush1.msra.mxu0 %v625
      %757 = vmatprep.subr.mxu0 0.0
      %758 = vmatpush1.msra.mxu0 %v624
      %759 = vmatprep.subr.mxu0 0.0
      %760 = vmatpush1.msra.mxu0 %v623
      %761 = vmatprep.subr.mxu0 0.0
      %762 = vmatpush2.msra.mxu0 0.0
      %763 = vmatprep.subr.mxu0 0.0
      %764 = vmatpush2.msra.mxu0 0.0
      %765 = vmatprep.subr.mxu0 0.0
      %766 = vmatpush2.msra.mxu0 0.0
      %767 = vmatprep.subr.mxu0 0.0
      %768 = vmatpush2.msra.mxu0 0.0
      %769 = vmatprep.subr.mxu0 0.0
      %770 = vmatpush2.msra.mxu0 0.0
      %771 = vmatprep.subr.mxu0 0.0
      %772 = vmatpush2.msra.mxu0 0.0
      %773 = vmatprep.subr.mxu0 0.0
      %774 = vmatpush2.msra.mxu0 0.0
      %775 = vmatprep.subr.mxu0 0.0
      %776 = vmatpush2.msra.mxu0 0.0
      %777 = vmatprep.subr.mxu0 0.0
      %778 = vmatpush2.msra.mxu0 0.0
      %779 = vmatprep.subr.mxu0 0.0
      %780 = vmatpush2.msra.mxu0 0.0
      %781 = vmatprep.subr.mxu0 0.0
      %782 = vmatpush2.msra.mxu0 0.0
      %783 = vmatprep.subr.mxu0 0.0
      %784 = vmatpush2.msra.mxu0 0.0
      %785 = vmatprep.subr.mxu0 0.0
      %786 = vmatpush2.msra.mxu0 0.0
      %787 = vmatprep.subr.mxu0 0.0
      %788 = vmatpush2.msra.mxu0 0.0
      %789 = vmatprep.subr.mxu0 0.0
      %790 = vmatpush2.msra.mxu0 0.0
      %791 = vmatprep.subr.mxu0 0.0
      %792 = vmatpush2.msra.mxu0 0.0
      %793 = vmatprep.mubr.f32.mxu0 0.0
      %794 = vmatmul.mubr.f32.gmra.mxu0 %v670
      %v795 = vpop.f32.mrf.mxu0
      %v796 = vadd.f32 0.0, %v795
      %v797 = vpop.f32.mrf.mxu0
      %798 = vmatprep.mubr.f32.mxu0 0.0
      %799 = vmatmul.mubr.f32.gmra.mxu0 %v673
      %v800 = vpop.f32.mrf.mxu0
      %v801 = vadd.f32 0.0, %v800
      %v802 = vpop.f32.mrf.mxu0
      %803 = vmatprep.mubr.f32.mxu0 0.0
      %804 = vmatmul.mubr.f32.gmra.mxu0 %v676
      %v805 = vpop.f32.mrf.mxu0
      %v806 = vadd.f32 0.0, %v805
      %v807 = vpop.f32.mrf.mxu0
      %808 = vmatprep.mubr.f32.mxu0 0.0
      %809 = vmatmul.mubr.f32.gmra.mxu0 %v679
      %v810 = vpop.f32.mrf.mxu0
      %v811 = vadd.f32 0.0, %v810
      %v812 = vpop.f32.mrf.mxu0
      %813 = vmatprep.mubr.f32.mxu0 0.0
      %814 = vmatmul.mubr.f32.gmra.mxu0 %v682
      %v815 = vpop.f32.mrf.mxu0
      %v816 = vadd.f32 0.0, %v815
      %v817 = vpop.f32.mrf.mxu0
      %818 = vmatprep.mubr.f32.mxu0 0.0
      %819 = vmatmul.mubr.f32.gmra.mxu0 %v685
      %v820 = vpop.f32.mrf.mxu0
      %v821 = vadd.f32 0.0, %v820
      %v822 = vpop.f32.mrf.mxu0
      %823 = vmatprep.mubr.f32.mxu0 0.0
      %824 = vmatmul.mubr.f32.gmra.mxu0 %v688
      %v825 = vpop.f32.mrf.mxu0
      %v826 = vadd.f32 0.0, %v825
      %v827 = vpop.f32.mrf.mxu0
      %828 = vmatprep.mubr.f32.mxu0 0.0
      %829 = vmatmul.mubr.f32.gmra.mxu0 %v691
      %v830 = vpop.f32.mrf.mxu0
      %v831 = vadd.f32 0.0, %v830
      %v832 = vpop.f32.mrf.mxu0
      %833 = vmatprep.mubr.f32.mxu0 0.0
      %834 = vmatmul.mubr.f32.gmra.mxu0 %v694
      %v835 = vpop.f32.mrf.mxu0
      %v836 = vadd.f32 0.0, %v835
      %v837 = vpop.f32.mrf.mxu0
      %838 = vmatprep.mubr.f32.mxu0 0.0
      %839 = vmatmul.mubr.f32.gmra.mxu0 %v697
      %v840 = vpop.f32.mrf.mxu0
      %v841 = vadd.f32 0.0, %v840
      %v842 = vpop.f32.mrf.mxu0
      %843 = vmatprep.mubr.f32.mxu0 0.0
      %844 = vmatmul.mubr.f32.gmra.mxu0 %v700
      %v845 = vpop.f32.mrf.mxu0
      %v846 = vadd.f32 0.0, %v845
      %v847 = vpop.f32.mrf.mxu0
      %848 = vmatprep.mubr.f32.mxu0 0.0
      %849 = vmatmul.mubr.f32.gmra.mxu0 %v703
      %v850 = vpop.f32.mrf.mxu0
      %v851 = vadd.f32 0.0, %v850
      %v852 = vpop.f32.mrf.mxu0
      %853 = vmatprep.mubr.f32.mxu0 0.0
      %854 = vmatmul.mubr.f32.gmra.mxu0 %v706
      %v855 = vpop.f32.mrf.mxu0
      %v856 = vadd.f32 0.0, %v855
      %v857 = vpop.f32.mrf.mxu0
      %858 = vmatprep.mubr.f32.mxu0 0.0
      %859 = vmatmul.mubr.f32.gmra.mxu0 %v709
      %v860 = vpop.f32.mrf.mxu0
      %v861 = vadd.f32 0.0, %v860
      %v862 = vpop.f32.mrf.mxu0
      %863 = vmatprep.mubr.f32.mxu0 0.0
      %864 = vmatmul.mubr.f32.gmra.mxu0 %v712
      %v865 = vpop.f32.mrf.mxu0
      %v866 = vadd.f32 0.0, %v865
      %v867 = vpop.f32.mrf.mxu0
      %868 = vmatprep.mubr.f32.mxu0 0.0
      %869 = vmatmul.mubr.f32.gmra.mxu0 %v715
      %v870 = vpop.f32.mrf.mxu0
      %v871 = vadd.f32 0.0, %v870
      %v872 = vpop.f32.mrf.mxu0
      %873 = vmatprep.mubr.f32.mxu0 0.0
      %874 = vmatmul.mubr.f32.gmra.mxu0 %v718
      %v875 = vpop.f32.mrf.mxu0
      %v876 = vadd.f32 0.0, %v875
      %v877 = vpop.f32.mrf.mxu0
      %878 = vmatprep.mubr.f32.mxu0 0.0
      %879 = vmatmul.mubr.f32.gmra.mxu0 %v721
      %v880 = vpop.f32.mrf.mxu0
      %v881 = vadd.f32 0.0, %v880
      %v882 = vpop.f32.mrf.mxu0
      %883 = vmatprep.mubr.f32.mxu0 0.0
      %884 = vmatmul.mubr.f32.gmra.mxu0 %v724
      %v885 = vpop.f32.mrf.mxu0
      %v886 = vadd.f32 0.0, %v885
      %v887 = vpop.f32.mrf.mxu0
      %888 = vmatprep.mubr.f32.mxu0 0.0
      %889 = vmatmul.mubr.f32.gmra.mxu0 %v727
      %v890 = vpop.f32.mrf.mxu0
      %v891 = vadd.f32 0.0, %v890
      %v892 = vpop.f32.mrf.mxu0
      %893 = vdwg.mxu0
      %v894 = vld [vmem:[%s3] sm:$0xff]
      %v895 = vld [vmem:[%s3 + $0x8] sm:$0xff]
      %v896 = vld [vmem:[%s3 + $0x10] sm:$0xff]
      %v897 = vld [vmem:[%s3 + $0x18] sm:$0xff]
      %v898 = vld [vmem:[%s3 + $0x20] sm:$0xff]
      %v899 = vld [vmem:[%s3 + $0x28] sm:$0xff]
      %v900 = vld [vmem:[%s3 + $0x30] sm:$0xff]
      %v901 = vld [vmem:[%s3 + $0x38] sm:$0xff]
      %v902 = vld [vmem:[%s3 + $0x40] sm:$0xff]
      %v903 = vld [vmem:[%s3 + $0x48] sm:$0xff]
      %v904 = vld [vmem:[%s3 + $0x50] sm:$0xff]
      %v905 = vld [vmem:[%s3 + $0x58] sm:$0xff]
      %v906 = vld [vmem:[%s3 + $0x60] sm:$0xff]
      %v907 = vld [vmem:[%s3 + $0x68] sm:$0xff]
      %v908 = vld [vmem:[%s3 + $0x70] sm:$0xff]
      %v909 = vld [vmem:[%s3 + $0x78] sm:$0xff]
      %v910 = vld [vmem:[%s3 + $0x80] sm:$0xff]
      %v911 = vld [vmem:[%s3 + $0x88] sm:$0xff]
      %v912 = vld [vmem:[%s3 + $0x90] sm:$0xff]
      %v913 = vld [vmem:[%s3 + $0x98] sm:$0xff]
      %v915 = vsel %vm668, %v894, 0
      %v918 = vsel %vm668, %v895, 0
      %v921 = vsel %vm668, %v896, 0
      %v924 = vsel %vm668, %v897, 0
      %v927 = vsel %vm668, %v898, 0
      %v930 = vsel %vm668, %v899, 0
      %v933 = vsel %vm668, %v900, 0
      %v936 = vsel %vm668, %v901, 0
      %v939 = vsel %vm668, %v902, 0
      %v942 = vsel %vm668, %v903, 0
      %v945 = vsel %vm668, %v904, 0
      %v948 = vsel %vm668, %v905, 0
      %v951 = vsel %vm668, %v906, 0
      %v954 = vsel %vm668, %v907, 0
      %v957 = vsel %vm668, %v908, 0
      %v960 = vsel %vm668, %v909, 0
      %v963 = vsel %vm668, %v910, 0
      %v966 = vsel %vm668, %v911, 0
      %v969 = vsel %vm668, %v912, 0
      %v972 = vsel %vm668, %v913, 0
      %974 = vmatprep.subr.mxu0 0.0
      %975 = vmatpush1.msra.mxu0 0.0
      %976 = vmatprep.subr.mxu0 0.0
      %977 = vmatpush1.msra.mxu0 0.0
      %978 = vmatprep.subr.mxu0 0.0
      %979 = vmatpush1.msra.mxu0 0.0
      %980 = vmatprep.subr.mxu0 0.0
      %981 = vmatpush1.msra.mxu0 0.0
      %982 = vmatprep.subr.mxu0 0.0
      %983 = vmatpush1.msra.mxu0 0.0
      %984 = vmatprep.subr.mxu0 0.0
      %985 = vmatpush1.msra.mxu0 0.0
      %986 = vmatprep.subr.mxu0 0.0
      %987 = vmatpush1.msra.mxu0 0.0
      %988 = vmatprep.subr.mxu0 0.0
      %989 = vmatpush1.msra.mxu0 0.0
      %990 = vmatprep.subr.mxu0 0.0
      %991 = vmatpush1.msra.mxu0 0.0
      %992 = vmatprep.subr.mxu0 0.0
      %993 = vmatpush1.msra.mxu0 0.0
      %994 = vmatprep.subr.mxu0 0.0
      %995 = vmatpush1.msra.mxu0 0.0
      %996 = vmatprep.subr.mxu0 0.0
      %997 = vmatpush1.msra.mxu0 %v627
      %998 = vmatprep.subr.mxu0 0.0
      %999 = vmatpush1.msra.mxu0 %v626
      %1000 = vmatprep.subr.mxu0 0.0
      %1001 = vmatpush1.msra.mxu0 %v625
      %1002 = vmatprep.subr.mxu0 0.0
      %1003 = vmatpush1.msra.mxu0 %v624
      %1004 = vmatprep.subr.mxu0 0.0
      %1005 = vmatpush1.msra.mxu0 %v623
      %1006 = vmatprep.subr.mxu0 0.0
      %1007 = vmatpush2.msra.mxu0 0.0
      %1008 = vmatprep.subr.mxu0 0.0
      %1009 = vmatpush2.msra.mxu0 0.0
      %1010 = vmatprep.subr.mxu0 0.0
      %1011 = vmatpush2.msra.mxu0 0.0
      %1012 = vmatprep.subr.mxu0 0.0
      %1013 = vmatpush2.msra.mxu0 0.0
      %1014 = vmatprep.subr.mxu0 0.0
      %1015 = vmatpush2.msra.mxu0 0.0
      %1016 = vmatprep.subr.mxu0 0.0
      %1017 = vmatpush2.msra.mxu0 0.0
      %1018 = vmatprep.subr.mxu0 0.0
      %1019 = vmatpush2.msra.mxu0 0.0
      %1020 = vmatprep.subr.mxu0 0.0
      %1021 = vmatpush2.msra.mxu0 0.0
      %1022 = vmatprep.subr.mxu0 0.0
      %1023 = vmatpush2.msra.mxu0 0.0
      %1024 = vmatprep.subr.mxu0 0.0
      %1025 = vmatpush2.msra.mxu0 0.0
      %1026 = vmatprep.subr.mxu0 0.0
      %1027 = vmatpush2.msra.mxu0 0.0
      %1028 = vmatprep.subr.mxu0 0.0
      %1029 = vmatpush2.msra.mxu0 0.0
      %1030 = vmatprep.subr.mxu0 0.0
      %1031 = vmatpush2.msra.mxu0 0.0
      %1032 = vmatprep.subr.mxu0 0.0
      %1033 = vmatpush2.msra.mxu0 0.0
      %1034 = vmatprep.subr.mxu0 0.0
      %1035 = vmatpush2.msra.mxu0 0.0
      %1036 = vmatprep.subr.mxu0 0.0
      %1037 = vmatpush2.msra.mxu0 0.0
      %1038 = vmatprep.mubr.f32.mxu0 0.0
      %1039 = vmatmul.mubr.f32.gmra.mxu0 %v915
      %v1040 = vpop.f32.mrf.mxu0
      %v1041 = vadd.f32 0.0, %v1040
      %v1042 = vpop.f32.mrf.mxu0
      %1043 = vmatprep.mubr.f32.mxu0 0.0
      %1044 = vmatmul.mubr.f32.gmra.mxu0 %v918
      %v1045 = vpop.f32.mrf.mxu0
      %v1046 = vadd.f32 0.0, %v1045
      %v1047 = vpop.f32.mrf.mxu0
      %1048 = vmatprep.mubr.f32.mxu0 0.0
      %1049 = vmatmul.mubr.f32.gmra.mxu0 %v921
      %v1050 = vpop.f32.mrf.mxu0
      %v1051 = vadd.f32 0.0, %v1050
      %v1052 = vpop.f32.mrf.mxu0
      %1053 = vmatprep.mubr.f32.mxu0 0.0
      %1054 = vmatmul.mubr.f32.gmra.mxu0 %v924
      %v1055 = vpop.f32.mrf.mxu0
      %v1056 = vadd.f32 0.0, %v1055
      %v1057 = vpop.f32.mrf.mxu0
      %1058 = vmatprep.mubr.f32.mxu0 0.0
      %1059 = vmatmul.mubr.f32.gmra.mxu0 %v927
      %v1060 = vpop.f32.mrf.mxu0
      %v1061 = vadd.f32 0.0, %v1060
      %v1062 = vpop.f32.mrf.mxu0
      %1063 = vmatprep.mubr.f32.mxu0 0.0
      %1064 = vmatmul.mubr.f32.gmra.mxu0 %v930
      %v1065 = vpop.f32.mrf.mxu0
      %v1066 = vadd.f32 0.0, %v1065
      %v1067 = vpop.f32.mrf.mxu0
      %1068 = vmatprep.mubr.f32.mxu0 0.0
      %1069 = vmatmul.mubr.f32.gmra.mxu0 %v933
      %v1070 = vpop.f32.mrf.mxu0
      %v1071 = vadd.f32 0.0, %v1070
      %v1072 = vpop.f32.mrf.mxu0
      %1073 = vmatprep.mubr.f32.mxu0 0.0
      %1074 = vmatmul.mubr.f32.gmra.mxu0 %v936
      %v1075 = vpop.f32.mrf.mxu0
      %v1076 = vadd.f32 0.0, %v1075
      %v1077 = vpop.f32.mrf.mxu0
      %1078 = vmatprep.mubr.f32.mxu0 0.0
      %1079 = vmatmul.mubr.f32.gmra.mxu0 %v939
      %v1080 = vpop.f32.mrf.mxu0
      %v1081 = vadd.f32 0.0, %v1080
      %v1082 = vpop.f32.mrf.mxu0
      %1083 = vmatprep.mubr.f32.mxu0 0.0
      %1084 = vmatmul.mubr.f32.gmra.mxu0 %v942
      %v1085 = vpop.f32.mrf.mxu0
      %v1086 = vadd.f32 0.0, %v1085
      %v1087 = vpop.f32.mrf.mxu0
      %1088 = vmatprep.mubr.f32.mxu0 0.0
      %1089 = vmatmul.mubr.f32.gmra.mxu0 %v945
      %v1090 = vpop.f32.mrf.mxu0
      %v1091 = vadd.f32 0.0, %v1090
      %v1092 = vpop.f32.mrf.mxu0
      %1093 = vmatprep.mubr.f32.mxu0 0.0
      %1094 = vmatmul.mubr.f32.gmra.mxu0 %v948
      %v1095 = vpop.f32.mrf.mxu0
      %v1096 = vadd.f32 0.0, %v1095
      %v1097 = vpop.f32.mrf.mxu0
      %1098 = vmatprep.mubr.f32.mxu0 0.0
      %1099 = vmatmul.mubr.f32.gmra.mxu0 %v951
      %v1100 = vpop.f32.mrf.mxu0
      %v1101 = vadd.f32 0.0, %v1100
      %v1102 = vpop.f32.mrf.mxu0
      %1103 = vmatprep.mubr.f32.mxu0 0.0
      %1104 = vmatmul.mubr.f32.gmra.mxu0 %v954
      %v1105 = vpop.f32.mrf.mxu0
      %v1106 = vadd.f32 0.0, %v1105
      %v1107 = vpop.f32.mrf.mxu0
      %1108 = vmatprep.mubr.f32.mxu0 0.0
      %1109 = vmatmul.mubr.f32.gmra.mxu0 %v957
      %v1110 = vpop.f32.mrf.mxu0
      %v1111 = vadd.f32 0.0, %v1110
      %v1112 = vpop.f32.mrf.mxu0
      %1113 = vmatprep.mubr.f32.mxu0 0.0
      %1114 = vmatmul.mubr.f32.gmra.mxu0 %v960
      %v1115 = vpop.f32.mrf.mxu0
      %v1116 = vadd.f32 0.0, %v1115
      %v1117 = vpop.f32.mrf.mxu0
      %1118 = vmatprep.mubr.f32.mxu0 0.0
      %1119 = vmatmul.mubr.f32.gmra.mxu0 %v963
      %v1120 = vpop.f32.mrf.mxu0
      %v1121 = vadd.f32 0.0, %v1120
      %v1122 = vpop.f32.mrf.mxu0
      %1123 = vmatprep.mubr.f32.mxu0 0.0
      %1124 = vmatmul.mubr.f32.gmra.mxu0 %v966
      %v1125 = vpop.f32.mrf.mxu0
      %v1126 = vadd.f32 0.0, %v1125
      %v1127 = vpop.f32.mrf.mxu0
      %1128 = vmatprep.mubr.f32.mxu0 0.0
      %1129 = vmatmul.mubr.f32.gmra.mxu0 %v969
      %v1130 = vpop.f32.mrf.mxu0
      %v1131 = vadd.f32 0.0, %v1130
      %v1132 = vpop.f32.mrf.mxu0
      %1133 = vmatprep.mubr.f32.mxu0 0.0
      %1134 = vmatmul.mubr.f32.gmra.mxu0 %v972
      %v1135 = vpop.f32.mrf.mxu0
      %v1136 = vadd.f32 0.0, %v1135
      %v1137 = vpop.f32.mrf.mxu0
      %1138 = vdwg.mxu0
      %v1139 = vld [vmem:[%s5] sm:$0xf]
      %v1140 = vld [vmem:[%s6] sm:$0xf]
      %vm1141 = vcmask 31744
      %v1143 = vsel %vm1141, %v1041, 0
      %v1146 = vsel %vm1141, %v1046, 0
      %v1149 = vsel %vm1141, %v1051, 0
      %v1152 = vsel %vm1141, %v1056, 0
      %v1155 = vsel %vm1141, %v1061, 0
      %v1158 = vsel %vm1141, %v1066, 0
      %v1161 = vsel %vm1141, %v1071, 0
      %v1164 = vsel %vm1141, %v1076, 0
      %v1167 = vsel %vm1141, %v1081, 0
      %v1170 = vsel %vm1141, %v1086, 0
      %v1173 = vsel %vm1141, %v1091, 0
      %v1176 = vsel %vm1141, %v1096, 0
      %v1179 = vsel %vm1141, %v1101, 0
      %v1182 = vsel %vm1141, %v1106, 0
      %v1185 = vsel %vm1141, %v1111, 0
      %v1188 = vsel %vm1141, %v1116, 0
      %v1191 = vsel %vm1141, %v1121, 0
      %v1194 = vsel %vm1141, %v1126, 0
      %v1197 = vsel %vm1141, %v1131, 0
      %v1200 = vsel %vm1141, %v1136, 0
      %vm1202 = vcmask 1043456
      %v1204 = vsel %vm1202, %v1140, 0
      %1206 = vmatprep.subr.mxu0 0.0
      %1207 = vmatpush1.msra.mxu0 0.0
      %1208 = vmatprep.subr.mxu0 0.0
      %1209 = vmatpush1.msra.mxu0 0.0
      %1210 = vmatprep.subr.mxu0 0.0
      %1211 = vmatpush1.msra.mxu0 0.0
      %1212 = vmatprep.subr.mxu0 0.0
      %1213 = vmatpush1.msra.mxu0 0.0
      %1214 = vmatprep.subr.mxu0 0.0
      %1215 = vmatpush1.msra.mxu0 0.0
      %1216 = vmatprep.subr.mxu0 0.0
      %1217 = vmatpush1.msra.mxu0 0.0
      %1218 = vmatprep.subr.mxu0 0.0
      %1219 = vmatpush1.msra.mxu0 0.0
      %1220 = vmatprep.subr.mxu0 0.0
      %1221 = vmatpush1.msra.mxu0 0.0
      %1222 = vmatprep.subr.mxu0 0.0
      %1223 = vmatpush1.msra.mxu0 0.0
      %1224 = vmatprep.subr.mxu0 0.0
      %1225 = vmatpush1.msra.mxu0 0.0
      %1226 = vmatprep.subr.mxu0 0.0
      %1227 = vmatpush1.msra.mxu0 0.0
      %1228 = vmatprep.subr.mxu0 0.0
      %1229 = vmatpush1.msra.mxu0 0.0
      %1230 = vmatprep.subr.mxu0 0.0
      %1231 = vmatpush1.msra.mxu0 0.0
      %1232 = vmatprep.subr.mxu0 0.0
      %1233 = vmatpush1.msra.mxu0 0.0
      %1234 = vmatprep.subr.mxu0 0.0
      %1235 = vmatpush1.msra.mxu0 0.0
      %1236 = vmatprep.subr.mxu0 0.0
      %1237 = vmatpush1.msra.mxu0 %v1204
      %1238 = vmatprep.subr.mxu0 0.0
      %1239 = vmatpush2.msra.mxu0 0.0
      %1240 = vmatprep.subr.mxu0 0.0
      %1241 = vmatpush2.msra.mxu0 0.0
      %1242 = vmatprep.subr.mxu0 0.0
      %1243 = vmatpush2.msra.mxu0 0.0
      %1244 = vmatprep.subr.mxu0 0.0
      %1245 = vmatpush2.msra.mxu0 0.0
      %1246 = vmatprep.subr.mxu0 0.0
      %1247 = vmatpush2.msra.mxu0 0.0
      %1248 = vmatprep.subr.mxu0 0.0
      %1249 = vmatpush2.msra.mxu0 0.0
      %1250 = vmatprep.subr.mxu0 0.0
      %1251 = vmatpush2.msra.mxu0 0.0
      %1252 = vmatprep.subr.mxu0 0.0
      %1253 = vmatpush2.msra.mxu0 0.0
      %1254 = vmatprep.subr.mxu0 0.0
      %1255 = vmatpush2.msra.mxu0 0.0
      %1256 = vmatprep.subr.mxu0 0.0
      %1257 = vmatpush2.msra.mxu0 0.0
      %1258 = vmatprep.subr.mxu0 0.0
      %1259 = vmatpush2.msra.mxu0 0.0
      %1260 = vmatprep.subr.mxu0 0.0
      %1261 = vmatpush2.msra.mxu0 0.0
      %1262 = vmatprep.subr.mxu0 0.0
      %1263 = vmatpush2.msra.mxu0 0.0
      %1264 = vmatprep.subr.mxu0 0.0
      %1265 = vmatpush2.msra.mxu0 0.0
      %1266 = vmatprep.subr.mxu0 0.0
      %1267 = vmatpush2.msra.mxu0 0.0
      %1268 = vmatprep.subr.mxu0 0.0
      %1269 = vmatpush2.msra.mxu0 0.0
      %1270 = vmatprep.mubr.f32.mxu0 0.0
      %1271 = vmatmul.mubr.f32.gmra.mxu0 %v1143
      %v1272 = vpop.f32.mrf.mxu0
      %v1273 = vadd.f32 0.0, %v1272
      %v1274 = vpop.f32.mrf.mxu0
      %1275 = vmatprep.mubr.f32.mxu0 0.0
      %1276 = vmatmul.mubr.f32.gmra.mxu0 %v1146
      %v1277 = vpop.f32.mrf.mxu0
      %v1278 = vadd.f32 0.0, %v1277
      %v1279 = vpop.f32.mrf.mxu0
      %1280 = vmatprep.mubr.f32.mxu0 0.0
      %1281 = vmatmul.mubr.f32.gmra.mxu0 %v1149
      %v1282 = vpop.f32.mrf.mxu0
      %v1283 = vadd.f32 0.0, %v1282
      %v1284 = vpop.f32.mrf.mxu0
      %1285 = vmatprep.mubr.f32.mxu0 0.0
      %1286 = vmatmul.mubr.f32.gmra.mxu0 %v1152
      %v1287 = vpop.f32.mrf.mxu0
      %v1288 = vadd.f32 0.0, %v1287
      %v1289 = vpop.f32.mrf.mxu0
      %1290 = vmatprep.mubr.f32.mxu0 0.0
      %1291 = vmatmul.mubr.f32.gmra.mxu0 %v1155
      %v1292 = vpop.f32.mrf.mxu0
      %v1293 = vadd.f32 0.0, %v1292
      %v1294 = vpop.f32.mrf.mxu0
      %1295 = vmatprep.mubr.f32.mxu0 0.0
      %1296 = vmatmul.mubr.f32.gmra.mxu0 %v1158
      %v1297 = vpop.f32.mrf.mxu0
      %v1298 = vadd.f32 0.0, %v1297
      %v1299 = vpop.f32.mrf.mxu0
      %1300 = vmatprep.mubr.f32.mxu0 0.0
      %1301 = vmatmul.mubr.f32.gmra.mxu0 %v1161
      %v1302 = vpop.f32.mrf.mxu0
      %v1303 = vadd.f32 0.0, %v1302
      %v1304 = vpop.f32.mrf.mxu0
      %1305 = vmatprep.mubr.f32.mxu0 0.0
      %1306 = vmatmul.mubr.f32.gmra.mxu0 %v1164
      %v1307 = vpop.f32.mrf.mxu0
      %v1308 = vadd.f32 0.0, %v1307
      %v1309 = vpop.f32.mrf.mxu0
      %1310 = vmatprep.mubr.f32.mxu0 0.0
      %1311 = vmatmul.mubr.f32.gmra.mxu0 %v1167
      %v1312 = vpop.f32.mrf.mxu0
      %v1313 = vadd.f32 0.0, %v1312
      %v1314 = vpop.f32.mrf.mxu0
      %1315 = vmatprep.mubr.f32.mxu0 0.0
      %1316 = vmatmul.mubr.f32.gmra.mxu0 %v1170
      %v1317 = vpop.f32.mrf.mxu0
      %v1318 = vadd.f32 0.0, %v1317
      %v1319 = vpop.f32.mrf.mxu0
      %1320 = vmatprep.mubr.f32.mxu0 0.0
      %1321 = vmatmul.mubr.f32.gmra.mxu0 %v1173
      %v1322 = vpop.f32.mrf.mxu0
      %v1323 = vadd.f32 0.0, %v1322
      %v1324 = vpop.f32.mrf.mxu0
      %1325 = vmatprep.mubr.f32.mxu0 0.0
      %1326 = vmatmul.mubr.f32.gmra.mxu0 %v1176
      %v1327 = vpop.f32.mrf.mxu0
      %v1328 = vadd.f32 0.0, %v1327
      %v1329 = vpop.f32.mrf.mxu0
      %1330 = vmatprep.mubr.f32.mxu0 0.0
      %1331 = vmatmul.mubr.f32.gmra.mxu0 %v1179
      %v1332 = vpop.f32.mrf.mxu0
      %v1333 = vadd.f32 0.0, %v1332
      %v1334 = vpop.f32.mrf.mxu0
      %1335 = vmatprep.mubr.f32.mxu0 0.0
      %1336 = vmatmul.mubr.f32.gmra.mxu0 %v1182
      %v1337 = vpop.f32.mrf.mxu0
      %v1338 = vadd.f32 0.0, %v1337
      %v1339 = vpop.f32.mrf.mxu0
      %1340 = vmatprep.mubr.f32.mxu0 0.0
      %1341 = vmatmul.mubr.f32.gmra.mxu0 %v1185
      %v1342 = vpop.f32.mrf.mxu0
      %v1343 = vadd.f32 0.0, %v1342
      %v1344 = vpop.f32.mrf.mxu0
      %1345 = vmatprep.mubr.f32.mxu0 0.0
      %1346 = vmatmul.mubr.f32.gmra.mxu0 %v1188
      %v1347 = vpop.f32.mrf.mxu0
      %v1348 = vadd.f32 0.0, %v1347
      %v1349 = vpop.f32.mrf.mxu0
      %1350 = vmatprep.mubr.f32.mxu0 0.0
      %1351 = vmatmul.mubr.f32.gmra.mxu0 %v1191
      %v1352 = vpop.f32.mrf.mxu0
      %v1353 = vadd.f32 0.0, %v1352
      %v1354 = vpop.f32.mrf.mxu0
      %1355 = vmatprep.mubr.f32.mxu0 0.0
      %1356 = vmatmul.mubr.f32.gmra.mxu0 %v1194
      %v1357 = vpop.f32.mrf.mxu0
      %v1358 = vadd.f32 0.0, %v1357
      %v1359 = vpop.f32.mrf.mxu0
      %1360 = vmatprep.mubr.f32.mxu0 0.0
      %1361 = vmatmul.mubr.f32.gmra.mxu0 %v1197
      %v1362 = vpop.f32.mrf.mxu0
      %v1363 = vadd.f32 0.0, %v1362
      %v1364 = vpop.f32.mrf.mxu0
      %1365 = vmatprep.mubr.f32.mxu0 0.0
      %1366 = vmatmul.mubr.f32.gmra.mxu0 %v1200
      %v1367 = vpop.f32.mrf.mxu0
      %v1368 = vadd.f32 0.0, %v1367
      %v1369 = vpop.f32.mrf.mxu0
      %1370 = vdwg.mxu0
      %v1372 = vsel %vm1141, %v796, 0
      %v1375 = vsel %vm1141, %v801, 0
      %v1378 = vsel %vm1141, %v806, 0
      %v1381 = vsel %vm1141, %v811, 0
      %v1384 = vsel %vm1141, %v816, 0
      %v1387 = vsel %vm1141, %v821, 0
      %v1390 = vsel %vm1141, %v826, 0
      %v1393 = vsel %vm1141, %v831, 0
      %v1396 = vsel %vm1141, %v836, 0
      %v1399 = vsel %vm1141, %v841, 0
      %v1402 = vsel %vm1141, %v846, 0
      %v1405 = vsel %vm1141, %v851, 0
      %v1408 = vsel %vm1141, %v856, 0
      %v1411 = vsel %vm1141, %v861, 0
      %v1414 = vsel %vm1141, %v866, 0
      %v1417 = vsel %vm1141, %v871, 0
      %v1420 = vsel %vm1141, %v876, 0
      %v1423 = vsel %vm1141, %v881, 0
      %v1426 = vsel %vm1141, %v886, 0
      %v1429 = vsel %vm1141, %v891, 0
      %v1432 = vsel %vm1202, %v1139, 0
      %1434 = vmatprep.subr.mxu0 0.0
      %1435 = vmatpush1.msra.mxu0 0.0
      %1436 = vmatprep.subr.mxu0 0.0
      %1437 = vmatpush1.msra.mxu0 0.0
      %1438 = vmatprep.subr.mxu0 0.0
      %1439 = vmatpush1.msra.mxu0 0.0
      %1440 = vmatprep.subr.mxu0 0.0
      %1441 = vmatpush1.msra.mxu0 0.0
      %1442 = vmatprep.subr.mxu0 0.0
      %1443 = vmatpush1.msra.mxu0 0.0
      %1444 = vmatprep.subr.mxu0 0.0
      %1445 = vmatpush1.msra.mxu0 0.0
      %1446 = vmatprep.subr.mxu0 0.0
      %1447 = vmatpush1.msra.mxu0 0.0
      %1448 = vmatprep.subr.mxu0 0.0
      %1449 = vmatpush1.msra.mxu0 0.0
      %1450 = vmatprep.subr.mxu0 0.0
      %1451 = vmatpush1.msra.mxu0 0.0
      %1452 = vmatprep.subr.mxu0 0.0
      %1453 = vmatpush1.msra.mxu0 0.0
      %1454 = vmatprep.subr.mxu0 0.0
      %1455 = vmatpush1.msra.mxu0 0.0
      %1456 = vmatprep.subr.mxu0 0.0
      %1457 = vmatpush1.msra.mxu0 0.0
      %1458 = vmatprep.subr.mxu0 0.0
      %1459 = vmatpush1.msra.mxu0 0.0
      %1460 = vmatprep.subr.mxu0 0.0
      %1461 = vmatpush1.msra.mxu0 0.0
      %1462 = vmatprep.subr.mxu0 0.0
      %1463 = vmatpush1.msra.mxu0 0.0
      %1464 = vmatprep.subr.mxu0 0.0
      %1465 = vmatpush1.msra.mxu0 %v1432
      %1466 = vmatprep.subr.mxu0 0.0
      %1467 = vmatpush2.msra.mxu0 0.0
      %1468 = vmatprep.subr.mxu0 0.0
      %1469 = vmatpush2.msra.mxu0 0.0
      %1470 = vmatprep.subr.mxu0 0.0
      %1471 = vmatpush2.msra.mxu0 0.0
      %1472 = vmatprep.subr.mxu0 0.0
      %1473 = vmatpush2.msra.mxu0 0.0
      %1474 = vmatprep.subr.mxu0 0.0
      %1475 = vmatpush2.msra.mxu0 0.0
      %1476 = vmatprep.subr.mxu0 0.0
      %1477 = vmatpush2.msra.mxu0 0.0
      %1478 = vmatprep.subr.mxu0 0.0
      %1479 = vmatpush2.msra.mxu0 0.0
      %1480 = vmatprep.subr.mxu0 0.0
      %1481 = vmatpush2.msra.mxu0 0.0
      %1482 = vmatprep.subr.mxu0 0.0
      %1483 = vmatpush2.msra.mxu0 0.0
      %1484 = vmatprep.subr.mxu0 0.0
      %1485 = vmatpush2.msra.mxu0 0.0
      %1486 = vmatprep.subr.mxu0 0.0
      %1487 = vmatpush2.msra.mxu0 0.0
      %1488 = vmatprep.subr.mxu0 0.0
      %1489 = vmatpush2.msra.mxu0 0.0
      %1490 = vmatprep.subr.mxu0 0.0
      %1491 = vmatpush2.msra.mxu0 0.0
      %1492 = vmatprep.subr.mxu0 0.0
      %1493 = vmatpush2.msra.mxu0 0.0
      %1494 = vmatprep.subr.mxu0 0.0
      %1495 = vmatpush2.msra.mxu0 0.0
      %1496 = vmatprep.subr.mxu0 0.0
      %1497 = vmatpush2.msra.mxu0 0.0
      %1498 = vmatprep.mubr.f32.mxu0 0.0
      %1499 = vmatmul.mubr.f32.gmra.mxu0 %v1372
      %v1500 = vpop.f32.mrf.mxu0
      %v1501 = vadd.f32 %v1273, %v1500
      %v1502 = vpop.f32.mrf.mxu0
      %1503 = vmatprep.mubr.f32.mxu0 0.0
      %1504 = vmatmul.mubr.f32.gmra.mxu0 %v1375
      %v1505 = vpop.f32.mrf.mxu0
      %v1506 = vadd.f32 %v1278, %v1505
      %v1507 = vpop.f32.mrf.mxu0
      %1508 = vmatprep.mubr.f32.mxu0 0.0
      %1509 = vmatmul.mubr.f32.gmra.mxu0 %v1378
      %v1510 = vpop.f32.mrf.mxu0
      %v1511 = vadd.f32 %v1283, %v1510
      %v1512 = vpop.f32.mrf.mxu0
      %1513 = vmatprep.mubr.f32.mxu0 0.0
      %1514 = vmatmul.mubr.f32.gmra.mxu0 %v1381
      %v1515 = vpop.f32.mrf.mxu0
      %v1516 = vadd.f32 %v1288, %v1515
      %v1517 = vpop.f32.mrf.mxu0
      %1518 = vmatprep.mubr.f32.mxu0 0.0
      %1519 = vmatmul.mubr.f32.gmra.mxu0 %v1384
      %v1520 = vpop.f32.mrf.mxu0
      %v1521 = vadd.f32 %v1293, %v1520
      %v1522 = vpop.f32.mrf.mxu0
      %1523 = vmatprep.mubr.f32.mxu0 0.0
      %1524 = vmatmul.mubr.f32.gmra.mxu0 %v1387
      %v1525 = vpop.f32.mrf.mxu0
      %v1526 = vadd.f32 %v1298, %v1525
      %v1527 = vpop.f32.mrf.mxu0
      %1528 = vmatprep.mubr.f32.mxu0 0.0
      %1529 = vmatmul.mubr.f32.gmra.mxu0 %v1390
      %v1530 = vpop.f32.mrf.mxu0
      %v1531 = vadd.f32 %v1303, %v1530
      %v1532 = vpop.f32.mrf.mxu0
      %1533 = vmatprep.mubr.f32.mxu0 0.0
      %1534 = vmatmul.mubr.f32.gmra.mxu0 %v1393
      %v1535 = vpop.f32.mrf.mxu0
      %v1536 = vadd.f32 %v1308, %v1535
      %v1537 = vpop.f32.mrf.mxu0
      %1538 = vmatprep.mubr.f32.mxu0 0.0
      %1539 = vmatmul.mubr.f32.gmra.mxu0 %v1396
      %v1540 = vpop.f32.mrf.mxu0
      %v1541 = vadd.f32 %v1313, %v1540
      %v1542 = vpop.f32.mrf.mxu0
      %1543 = vmatprep.mubr.f32.mxu0 0.0
      %1544 = vmatmul.mubr.f32.gmra.mxu0 %v1399
      %v1545 = vpop.f32.mrf.mxu0
      %v1546 = vadd.f32 %v1318, %v1545
      %v1547 = vpop.f32.mrf.mxu0
      %1548 = vmatprep.mubr.f32.mxu0 0.0
      %1549 = vmatmul.mubr.f32.gmra.mxu0 %v1402
      %v1550 = vpop.f32.mrf.mxu0
      %v1551 = vadd.f32 %v1323, %v1550
      %v1552 = vpop.f32.mrf.mxu0
      %1553 = vmatprep.mubr.f32.mxu0 0.0
      %1554 = vmatmul.mubr.f32.gmra.mxu0 %v1405
      %v1555 = vpop.f32.mrf.mxu0
      %v1556 = vadd.f32 %v1328, %v1555
      %v1557 = vpop.f32.mrf.mxu0
      %1558 = vmatprep.mubr.f32.mxu0 0.0
      %1559 = vmatmul.mubr.f32.gmra.mxu0 %v1408
      %v1560 = vpop.f32.mrf.mxu0
      %v1561 = vadd.f32 %v1333, %v1560
      %v1562 = vpop.f32.mrf.mxu0
      %1563 = vmatprep.mubr.f32.mxu0 0.0
      %1564 = vmatmul.mubr.f32.gmra.mxu0 %v1411
      %v1565 = vpop.f32.mrf.mxu0
      %v1566 = vadd.f32 %v1338, %v1565
      %v1567 = vpop.f32.mrf.mxu0
      %1568 = vmatprep.mubr.f32.mxu0 0.0
      %1569 = vmatmul.mubr.f32.gmra.mxu0 %v1414
      %v1570 = vpop.f32.mrf.mxu0
      %v1571 = vadd.f32 %v1343, %v1570
      %v1572 = vpop.f32.mrf.mxu0
      %1573 = vmatprep.mubr.f32.mxu0 0.0
      %1574 = vmatmul.mubr.f32.gmra.mxu0 %v1417
      %v1575 = vpop.f32.mrf.mxu0
      %v1576 = vadd.f32 %v1348, %v1575
      %v1577 = vpop.f32.mrf.mxu0
      %1578 = vmatprep.mubr.f32.mxu0 0.0
      %1579 = vmatmul.mubr.f32.gmra.mxu0 %v1420
      %v1580 = vpop.f32.mrf.mxu0
      %v1581 = vadd.f32 %v1353, %v1580
      %v1582 = vpop.f32.mrf.mxu0
      %1583 = vmatprep.mubr.f32.mxu0 0.0
      %1584 = vmatmul.mubr.f32.gmra.mxu0 %v1423
      %v1585 = vpop.f32.mrf.mxu0
      %v1586 = vadd.f32 %v1358, %v1585
      %v1587 = vpop.f32.mrf.mxu0
      %1588 = vmatprep.mubr.f32.mxu0 0.0
      %1589 = vmatmul.mubr.f32.gmra.mxu0 %v1426
      %v1590 = vpop.f32.mrf.mxu0
      %v1591 = vadd.f32 %v1363, %v1590
      %v1592 = vpop.f32.mrf.mxu0
      %1593 = vmatprep.mubr.f32.mxu0 0.0
      %1594 = vmatmul.mubr.f32.gmra.mxu0 %v1429
      %v1595 = vpop.f32.mrf.mxu0
      %v1596 = vadd.f32 %v1368, %v1595
      %v1597 = vpop.f32.mrf.mxu0
      %1598 = vdwg.mxu0
      %v1599 = vld [vmem:[%s7] sm:$0x1]
      %v1601 = vlaneseq
      %v1602 = vshrl.u32 %v1601, 7
      %v1603 = vsub.s32 0, %v1602
      %v1604 = vrot.slane %v1599, %v1603
      %v1606 = vadd.f32 %v1501, %v1604
      %v1607 = vadd.f32 %v1506, %v1604
      %v1608 = vadd.f32 %v1511, %v1604
      %v1609 = vadd.f32 %v1516, %v1604
      %v1610 = vadd.f32 %v1521, %v1604
      %v1611 = vadd.f32 %v1526, %v1604
      %v1612 = vadd.f32 %v1531, %v1604
      %v1613 = vadd.f32 %v1536, %v1604
      %v1614 = vadd.f32 %v1541, %v1604
      %v1615 = vadd.f32 %v1546, %v1604
      %v1616 = vadd.f32 %v1551, %v1604
      %v1617 = vadd.f32 %v1556, %v1604
      %v1618 = vadd.f32 %v1561, %v1604
      %v1619 = vadd.f32 %v1566, %v1604
      %v1620 = vadd.f32 %v1571, %v1604
      %v1621 = vadd.f32 %v1576, %v1604
      %v1622 = vadd.f32 %v1581, %v1604
      %v1623 = vadd.f32 %v1586, %v1604
      %v1624 = vadd.f32 %v1591, %v1604
      %v1625 = vadd.f32 %v1596, %v1604
      %v1626 = vmax.f32 %v1606, 0.0
      %v1627 = vmax.f32 %v1607, 0.0
      %v1628 = vmax.f32 %v1608, 0.0
      %v1629 = vmax.f32 %v1609, 0.0
      %v1630 = vmax.f32 %v1610, 0.0
      %v1631 = vmax.f32 %v1611, 0.0
      %v1632 = vmax.f32 %v1612, 0.0
      %v1633 = vmax.f32 %v1613, 0.0
      %v1634 = vmax.f32 %v1614, 0.0
      %v1635 = vmax.f32 %v1615, 0.0
      %v1636 = vmax.f32 %v1616, 0.0
      %v1637 = vmax.f32 %v1617, 0.0
      %v1638 = vmax.f32 %v1618, 0.0
      %v1639 = vmax.f32 %v1619, 0.0
      %v1640 = vmax.f32 %v1620, 0.0
      %v1641 = vmax.f32 %v1621, 0.0
      %v1642 = vmax.f32 %v1622, 0.0
      %v1643 = vmax.f32 %v1623, 0.0
      %v1644 = vmax.f32 %v1624, 0.0
      %v1645 = vmax.f32 %v1625, 0.0
      %v1646 = vld [vmem:[%s8] sm:$0xff]
      %v1647 = vld [vmem:[%s8 + $0x8] sm:$0xff]
      %v1648 = vld [vmem:[%s8 + $0x10] sm:$0xff]
      %v1649 = vld [vmem:[%s8 + $0x18] sm:$0xff]
      %v1650 = vld [vmem:[%s8 + $0x20] sm:$0xff]
      %v1651 = vld [vmem:[%s8 + $0x28] sm:$0xff]
      %v1652 = vld [vmem:[%s8 + $0x30] sm:$0xff]
      %v1653 = vld [vmem:[%s8 + $0x38] sm:$0xff]
      %v1654 = vld [vmem:[%s9] sm:$0x1]
      %v1656 = vlaneseq
      %v1657 = vshrl.u32 %v1656, 7
      %v1658 = vsub.s32 0, %v1657
      %v1659 = vrot.slane %v1654, %v1658
      %vm1661 = vcmask 523264
      %v1663 = vsel %vm1661, %v1626, 0
      %v1666 = vsel %vm1661, %v1627, 0
      %v1669 = vsel %vm1661, %v1628, 0
      %v1672 = vsel %vm1661, %v1629, 0
      %v1675 = vsel %vm1661, %v1630, 0
      %v1678 = vsel %vm1661, %v1631, 0
      %v1681 = vsel %vm1661, %v1632, 0
      %v1684 = vsel %vm1661, %v1633, 0
      %v1687 = vsel %vm1661, %v1634, 0
      %v1690 = vsel %vm1661, %v1635, 0
      %v1693 = vsel %vm1661, %v1636, 0
      %v1696 = vsel %vm1661, %v1637, 0
      %v1699 = vsel %vm1661, %v1638, 0
      %v1702 = vsel %vm1661, %v1639, 0
      %v1705 = vsel %vm1661, %v1640, 0
      %v1708 = vsel %vm1661, %v1641, 0
      %v1711 = vsel %vm1661, %v1642, 0
      %v1714 = vsel %vm1661, %v1643, 0
      %v1717 = vsel %vm1661, %v1644, 0
      %v1720 = vsel %vm1661, %v1645, 0
      %1722 = vmatprep.subr.mxu0 0.0
      %1723 = vmatpush1.msra.mxu0 0.0
      %1724 = vmatprep.subr.mxu0 0.0
      %1725 = vmatpush1.msra.mxu0 0.0
      %1726 = vmatprep.subr.mxu0 0.0
      %1727 = vmatpush1.msra.mxu0 0.0
      %1728 = vmatprep.subr.mxu0 0.0
      %1729 = vmatpush1.msra.mxu0 0.0
      %1730 = vmatprep.subr.mxu0 0.0
      %1731 = vmatpush1.msra.mxu0 0.0
      %1732 = vmatprep.subr.mxu0 0.0
      %1733 = vmatpush1.msra.mxu0 0.0
      %1734 = vmatprep.subr.mxu0 0.0
      %1735 = vmatpush1.msra.mxu0 0.0
      %1736 = vmatprep.subr.mxu0 0.0
      %1737 = vmatpush1.msra.mxu0 0.0
      %1738 = vmatprep.subr.mxu0 0.0
      %1739 = vmatpush1.msra.mxu0 %v1653
      %1740 = vmatprep.subr.mxu0 0.0
      %1741 = vmatpush1.msra.mxu0 %v1652
      %1742 = vmatprep.subr.mxu0 0.0
      %1743 = vmatpush1.msra.mxu0 %v1651
      %1744 = vmatprep.subr.mxu0 0.0
      %1745 = vmatpush1.msra.mxu0 %v1650
      %1746 = vmatprep.subr.mxu0 0.0
      %1747 = vmatpush1.msra.mxu0 %v1649
      %1748 = vmatprep.subr.mxu0 0.0
      %1749 = vmatpush1.msra.mxu0 %v1648
      %1750 = vmatprep.subr.mxu0 0.0
      %1751 = vmatpush1.msra.mxu0 %v1647
      %1752 = vmatprep.subr.mxu0 0.0
      %1753 = vmatpush1.msra.mxu0 %v1646
      %1754 = vmatprep.subr.mxu0 0.0
      %1755 = vmatpush2.msra.mxu0 0.0
      %1756 = vmatprep.subr.mxu0 0.0
      %1757 = vmatpush2.msra.mxu0 0.0
      %1758 = vmatprep.subr.mxu0 0.0
      %1759 = vmatpush2.msra.mxu0 0.0
      %1760 = vmatprep.subr.mxu0 0.0
      %1761 = vmatpush2.msra.mxu0 0.0
      %1762 = vmatprep.subr.mxu0 0.0
      %1763 = vmatpush2.msra.mxu0 0.0
      %1764 = vmatprep.subr.mxu0 0.0
      %1765 = vmatpush2.msra.mxu0 0.0
      %1766 = vmatprep.subr.mxu0 0.0
      %1767 = vmatpush2.msra.mxu0 0.0
      %1768 = vmatprep.subr.mxu0 0.0
      %1769 = vmatpush2.msra.mxu0 0.0
      %1770 = vmatprep.subr.mxu0 0.0
      %1771 = vmatpush2.msra.mxu0 0.0
      %1772 = vmatprep.subr.mxu0 0.0
      %1773 = vmatpush2.msra.mxu0 0.0
      %1774 = vmatprep.subr.mxu0 0.0
      %1775 = vmatpush2.msra.mxu0 0.0
      %1776 = vmatprep.subr.mxu0 0.0
      %1777 = vmatpush2.msra.mxu0 0.0
      %1778 = vmatprep.subr.mxu0 0.0
      %1779 = vmatpush2.msra.mxu0 0.0
      %1780 = vmatprep.subr.mxu0 0.0
      %1781 = vmatpush2.msra.mxu0 0.0
      %1782 = vmatprep.subr.mxu0 0.0
      %1783 = vmatpush2.msra.mxu0 0.0
      %1784 = vmatprep.subr.mxu0 0.0
      %1785 = vmatpush2.msra.mxu0 0.0
      %1786 = vmatprep.mubr.f32.mxu0 0.0
      %1787 = vmatmul.mubr.f32.gmra.mxu0 %v1663
      %v1788 = vpop.f32.mrf.mxu0
      %v1789 = vadd.f32 %v1659, %v1788
      %v1790 = vpop.f32.mrf.mxu0
      %1791 = vmatprep.mubr.f32.mxu0 0.0
      %1792 = vmatmul.mubr.f32.gmra.mxu0 %v1666
      %v1793 = vpop.f32.mrf.mxu0
      %v1794 = vadd.f32 %v1659, %v1793
      %v1795 = vpop.f32.mrf.mxu0
      %1796 = vmatprep.mubr.f32.mxu0 0.0
      %1797 = vmatmul.mubr.f32.gmra.mxu0 %v1669
      %v1798 = vpop.f32.mrf.mxu0
      %v1799 = vadd.f32 %v1659, %v1798
      %v1800 = vpop.f32.mrf.mxu0
      %1801 = vmatprep.mubr.f32.mxu0 0.0
      %1802 = vmatmul.mubr.f32.gmra.mxu0 %v1672
      %v1803 = vpop.f32.mrf.mxu0
      %v1804 = vadd.f32 %v1659, %v1803
      %v1805 = vpop.f32.mrf.mxu0
      %1806 = vmatprep.mubr.f32.mxu0 0.0
      %1807 = vmatmul.mubr.f32.gmra.mxu0 %v1675
      %v1808 = vpop.f32.mrf.mxu0
      %v1809 = vadd.f32 %v1659, %v1808
      %v1810 = vpop.f32.mrf.mxu0
      %1811 = vmatprep.mubr.f32.mxu0 0.0
      %1812 = vmatmul.mubr.f32.gmra.mxu0 %v1678
      %v1813 = vpop.f32.mrf.mxu0
      %v1814 = vadd.f32 %v1659, %v1813
      %v1815 = vpop.f32.mrf.mxu0
      %1816 = vmatprep.mubr.f32.mxu0 0.0
      %1817 = vmatmul.mubr.f32.gmra.mxu0 %v1681
      %v1818 = vpop.f32.mrf.mxu0
      %v1819 = vadd.f32 %v1659, %v1818
      %v1820 = vpop.f32.mrf.mxu0
      %1821 = vmatprep.mubr.f32.mxu0 0.0
      %1822 = vmatmul.mubr.f32.gmra.mxu0 %v1684
      %v1823 = vpop.f32.mrf.mxu0
      %v1824 = vadd.f32 %v1659, %v1823
      %v1825 = vpop.f32.mrf.mxu0
      %1826 = vmatprep.mubr.f32.mxu0 0.0
      %1827 = vmatmul.mubr.f32.gmra.mxu0 %v1687
      %v1828 = vpop.f32.mrf.mxu0
      %v1829 = vadd.f32 %v1659, %v1828
      %v1830 = vpop.f32.mrf.mxu0
      %1831 = vmatprep.mubr.f32.mxu0 0.0
      %1832 = vmatmul.mubr.f32.gmra.mxu0 %v1690
      %v1833 = vpop.f32.mrf.mxu0
      %v1834 = vadd.f32 %v1659, %v1833
      %v1835 = vpop.f32.mrf.mxu0
      %1836 = vmatprep.mubr.f32.mxu0 0.0
      %1837 = vmatmul.mubr.f32.gmra.mxu0 %v1693
      %v1838 = vpop.f32.mrf.mxu0
      %v1839 = vadd.f32 %v1659, %v1838
      %v1840 = vpop.f32.mrf.mxu0
      %1841 = vmatprep.mubr.f32.mxu0 0.0
      %1842 = vmatmul.mubr.f32.gmra.mxu0 %v1696
      %v1843 = vpop.f32.mrf.mxu0
      %v1844 = vadd.f32 %v1659, %v1843
      %v1845 = vpop.f32.mrf.mxu0
      %1846 = vmatprep.mubr.f32.mxu0 0.0
      %1847 = vmatmul.mubr.f32.gmra.mxu0 %v1699
      %v1848 = vpop.f32.mrf.mxu0
      %v1849 = vadd.f32 %v1659, %v1848
      %v1850 = vpop.f32.mrf.mxu0
      %1851 = vmatprep.mubr.f32.mxu0 0.0
      %1852 = vmatmul.mubr.f32.gmra.mxu0 %v1702
      %v1853 = vpop.f32.mrf.mxu0
      %v1854 = vadd.f32 %v1659, %v1853
      %v1855 = vpop.f32.mrf.mxu0
      %1856 = vmatprep.mubr.f32.mxu0 0.0
      %1857 = vmatmul.mubr.f32.gmra.mxu0 %v1705
      %v1858 = vpop.f32.mrf.mxu0
      %v1859 = vadd.f32 %v1659, %v1858
      %v1860 = vpop.f32.mrf.mxu0
      %1861 = vmatprep.mubr.f32.mxu0 0.0
      %1862 = vmatmul.mubr.f32.gmra.mxu0 %v1708
      %v1863 = vpop.f32.mrf.mxu0
      %v1864 = vadd.f32 %v1659, %v1863
      %v1865 = vpop.f32.mrf.mxu0
      %1866 = vmatprep.mubr.f32.mxu0 0.0
      %1867 = vmatmul.mubr.f32.gmra.mxu0 %v1711
      %v1868 = vpop.f32.mrf.mxu0
      %v1869 = vadd.f32 %v1659, %v1868
      %v1870 = vpop.f32.mrf.mxu0
      %1871 = vmatprep.mubr.f32.mxu0 0.0
      %1872 = vmatmul.mubr.f32.gmra.mxu0 %v1714
      %v1873 = vpop.f32.mrf.mxu0
      %v1874 = vadd.f32 %v1659, %v1873
      %v1875 = vpop.f32.mrf.mxu0
      %1876 = vmatprep.mubr.f32.mxu0 0.0
      %1877 = vmatmul.mubr.f32.gmra.mxu0 %v1717
      %v1878 = vpop.f32.mrf.mxu0
      %v1879 = vadd.f32 %v1659, %v1878
      %v1880 = vpop.f32.mrf.mxu0
      %1881 = vmatprep.mubr.f32.mxu0 0.0
      %1882 = vmatmul.mubr.f32.gmra.mxu0 %v1720
      %v1883 = vpop.f32.mrf.mxu0
      %v1884 = vadd.f32 %v1659, %v1883
      %v1885 = vpop.f32.mrf.mxu0
      %1886 = vdwg.mxu0
      %v1887 = vmax.f32 %v1789, 0.0
      %v1888 = vmax.f32 %v1794, 0.0
      %v1889 = vmax.f32 %v1799, 0.0
      %v1890 = vmax.f32 %v1804, 0.0
      %v1891 = vmax.f32 %v1809, 0.0
      %v1892 = vmax.f32 %v1814, 0.0
      %v1893 = vmax.f32 %v1819, 0.0
      %v1894 = vmax.f32 %v1824, 0.0
      %v1895 = vmax.f32 %v1829, 0.0
      %v1896 = vmax.f32 %v1834, 0.0
      %v1897 = vmax.f32 %v1839, 0.0
      %v1898 = vmax.f32 %v1844, 0.0
      %v1899 = vmax.f32 %v1849, 0.0
      %v1900 = vmax.f32 %v1854, 0.0
      %v1901 = vmax.f32 %v1859, 0.0
      %v1902 = vmax.f32 %v1864, 0.0
      %v1903 = vmax.f32 %v1869, 0.0
      %v1904 = vmax.f32 %v1874, 0.0
      %v1905 = vmax.f32 %v1879, 0.0
      %v1906 = vmax.f32 %v1884, 0.0
      %v1907 = vld [vmem:[%s10] sm:$0x3]
      %vm1908 = vcmask 15360
      %v1910 = vsel %vm1908, %v628, 0
      %v1913 = vsel %vm1908, %v629, 0
      %v1916 = vsel %vm1908, %v630, 0
      %v1919 = vsel %vm1908, %v631, 0
      %v1922 = vsel %vm1908, %v632, 0
      %v1925 = vsel %vm1908, %v633, 0
      %v1928 = vsel %vm1908, %v634, 0
      %v1931 = vsel %vm1908, %v635, 0
      %v1934 = vsel %vm1908, %v636, 0
      %v1937 = vsel %vm1908, %v637, 0
      %v1940 = vsel %vm1908, %v638, 0
      %v1943 = vsel %vm1908, %v639, 0
      %v1946 = vsel %vm1908, %v640, 0
      %v1949 = vsel %vm1908, %v641, 0
      %v1952 = vsel %vm1908, %v642, 0
      %v1955 = vsel %vm1908, %v643, 0
      %v1958 = vsel %vm1908, %v644, 0
      %v1961 = vsel %vm1908, %v645, 0
      %v1964 = vsel %vm1908, %v646, 0
      %v1967 = vsel %vm1908, %v647, 0
      %vm1969 = vcmask 1041408
      %v1971 = vsel %vm1969, %v1907, 0
      %1973 = vmatprep.subr.mxu0 0.0
      %1974 = vmatpush1.msra.mxu0 0.0
      %1975 = vmatprep.subr.mxu0 0.0
      %1976 = vmatpush1.msra.mxu0 0.0
      %1977 = vmatprep.subr.mxu0 0.0
      %1978 = vmatpush1.msra.mxu0 0.0
      %1979 = vmatprep.subr.mxu0 0.0
      %1980 = vmatpush1.msra.mxu0 0.0
      %1981 = vmatprep.subr.mxu0 0.0
      %1982 = vmatpush1.msra.mxu0 0.0
      %1983 = vmatprep.subr.mxu0 0.0
      %1984 = vmatpush1.msra.mxu0 0.0
      %1985 = vmatprep.subr.mxu0 0.0
      %1986 = vmatpush1.msra.mxu0 0.0
      %1987 = vmatprep.subr.mxu0 0.0
      %1988 = vmatpush1.msra.mxu0 0.0
      %1989 = vmatprep.subr.mxu0 0.0
      %1990 = vmatpush1.msra.mxu0 0.0
      %1991 = vmatprep.subr.mxu0 0.0
      %1992 = vmatpush1.msra.mxu0 0.0
      %1993 = vmatprep.subr.mxu0 0.0
      %1994 = vmatpush1.msra.mxu0 0.0
      %1995 = vmatprep.subr.mxu0 0.0
      %1996 = vmatpush1.msra.mxu0 0.0
      %1997 = vmatprep.subr.mxu0 0.0
      %1998 = vmatpush1.msra.mxu0 0.0
      %1999 = vmatprep.subr.mxu0 0.0
      %2000 = vmatpush1.msra.mxu0 0.0
      %2001 = vmatprep.subr.mxu0 0.0
      %2002 = vmatpush1.msra.mxu0 0.0
      %2003 = vmatprep.subr.mxu0 0.0
      %2004 = vmatpush1.msra.mxu0 %v1971
      %2005 = vmatprep.subr.mxu0 0.0
      %2006 = vmatpush2.msra.mxu0 0.0
      %2007 = vmatprep.subr.mxu0 0.0
      %2008 = vmatpush2.msra.mxu0 0.0
      %2009 = vmatprep.subr.mxu0 0.0
      %2010 = vmatpush2.msra.mxu0 0.0
      %2011 = vmatprep.subr.mxu0 0.0
      %2012 = vmatpush2.msra.mxu0 0.0
      %2013 = vmatprep.subr.mxu0 0.0
      %2014 = vmatpush2.msra.mxu0 0.0
      %2015 = vmatprep.subr.mxu0 0.0
      %2016 = vmatpush2.msra.mxu0 0.0
      %2017 = vmatprep.subr.mxu0 0.0
      %2018 = vmatpush2.msra.mxu0 0.0
      %2019 = vmatprep.subr.mxu0 0.0
      %2020 = vmatpush2.msra.mxu0 0.0
      %2021 = vmatprep.subr.mxu0 0.0
      %2022 = vmatpush2.msra.mxu0 0.0
      %2023 = vmatprep.subr.mxu0 0.0
      %2024 = vmatpush2.msra.mxu0 0.0
      %2025 = vmatprep.subr.mxu0 0.0
      %2026 = vmatpush2.msra.mxu0 0.0
      %2027 = vmatprep.subr.mxu0 0.0
      %2028 = vmatpush2.msra.mxu0 0.0
      %2029 = vmatprep.subr.mxu0 0.0
      %2030 = vmatpush2.msra.mxu0 0.0
      %2031 = vmatprep.subr.mxu0 0.0
      %2032 = vmatpush2.msra.mxu0 0.0
      %2033 = vmatprep.subr.mxu0 0.0
      %2034 = vmatpush2.msra.mxu0 0.0
      %2035 = vmatprep.subr.mxu0 0.0
      %2036 = vmatpush2.msra.mxu0 0.0
      %2037 = vmatprep.mubr.f32.mxu0 0.0
      %2038 = vmatmul.mubr.f32.gmra.mxu0 %v1910
      %v2039 = vpop.f32.mrf.mxu0
      %v2040 = vadd.f32 0.0, %v2039
      %v2041 = vpop.f32.mrf.mxu0
      %2042 = vmatprep.mubr.f32.mxu0 0.0
      %2043 = vmatmul.mubr.f32.gmra.mxu0 %v1913
      %v2044 = vpop.f32.mrf.mxu0
      %v2045 = vadd.f32 0.0, %v2044
      %v2046 = vpop.f32.mrf.mxu0
      %2047 = vmatprep.mubr.f32.mxu0 0.0
      %2048 = vmatmul.mubr.f32.gmra.mxu0 %v1916
      %v2049 = vpop.f32.mrf.mxu0
      %v2050 = vadd.f32 0.0, %v2049
      %v2051 = vpop.f32.mrf.mxu0
      %2052 = vmatprep.mubr.f32.mxu0 0.0
      %2053 = vmatmul.mubr.f32.gmra.mxu0 %v1919
      %v2054 = vpop.f32.mrf.mxu0
      %v2055 = vadd.f32 0.0, %v2054
      %v2056 = vpop.f32.mrf.mxu0
      %2057 = vmatprep.mubr.f32.mxu0 0.0
      %2058 = vmatmul.mubr.f32.gmra.mxu0 %v1922
      %v2059 = vpop.f32.mrf.mxu0
      %v2060 = vadd.f32 0.0, %v2059
      %v2061 = vpop.f32.mrf.mxu0
      %2062 = vmatprep.mubr.f32.mxu0 0.0
      %2063 = vmatmul.mubr.f32.gmra.mxu0 %v1925
      %v2064 = vpop.f32.mrf.mxu0
      %v2065 = vadd.f32 0.0, %v2064
      %v2066 = vpop.f32.mrf.mxu0
      %2067 = vmatprep.mubr.f32.mxu0 0.0
      %2068 = vmatmul.mubr.f32.gmra.mxu0 %v1928
      %v2069 = vpop.f32.mrf.mxu0
      %v2070 = vadd.f32 0.0, %v2069
      %v2071 = vpop.f32.mrf.mxu0
      %2072 = vmatprep.mubr.f32.mxu0 0.0
      %2073 = vmatmul.mubr.f32.gmra.mxu0 %v1931
      %v2074 = vpop.f32.mrf.mxu0
      %v2075 = vadd.f32 0.0, %v2074
      %v2076 = vpop.f32.mrf.mxu0
      %2077 = vmatprep.mubr.f32.mxu0 0.0
      %2078 = vmatmul.mubr.f32.gmra.mxu0 %v1934
      %v2079 = vpop.f32.mrf.mxu0
      %v2080 = vadd.f32 0.0, %v2079
      %v2081 = vpop.f32.mrf.mxu0
      %2082 = vmatprep.mubr.f32.mxu0 0.0
      %2083 = vmatmul.mubr.f32.gmra.mxu0 %v1937
      %v2084 = vpop.f32.mrf.mxu0
      %v2085 = vadd.f32 0.0, %v2084
      %v2086 = vpop.f32.mrf.mxu0
      %2087 = vmatprep.mubr.f32.mxu0 0.0
      %2088 = vmatmul.mubr.f32.gmra.mxu0 %v1940
      %v2089 = vpop.f32.mrf.mxu0
      %v2090 = vadd.f32 0.0, %v2089
      %v2091 = vpop.f32.mrf.mxu0
      %2092 = vmatprep.mubr.f32.mxu0 0.0
      %2093 = vmatmul.mubr.f32.gmra.mxu0 %v1943
      %v2094 = vpop.f32.mrf.mxu0
      %v2095 = vadd.f32 0.0, %v2094
      %v2096 = vpop.f32.mrf.mxu0
      %2097 = vmatprep.mubr.f32.mxu0 0.0
      %2098 = vmatmul.mubr.f32.gmra.mxu0 %v1946
      %v2099 = vpop.f32.mrf.mxu0
      %v2100 = vadd.f32 0.0, %v2099
      %v2101 = vpop.f32.mrf.mxu0
      %2102 = vmatprep.mubr.f32.mxu0 0.0
      %2103 = vmatmul.mubr.f32.gmra.mxu0 %v1949
      %v2104 = vpop.f32.mrf.mxu0
      %v2105 = vadd.f32 0.0, %v2104
      %v2106 = vpop.f32.mrf.mxu0
      %2107 = vmatprep.mubr.f32.mxu0 0.0
      %2108 = vmatmul.mubr.f32.gmra.mxu0 %v1952
      %v2109 = vpop.f32.mrf.mxu0
      %v2110 = vadd.f32 0.0, %v2109
      %v2111 = vpop.f32.mrf.mxu0
      %2112 = vmatprep.mubr.f32.mxu0 0.0
      %2113 = vmatmul.mubr.f32.gmra.mxu0 %v1955
      %v2114 = vpop.f32.mrf.mxu0
      %v2115 = vadd.f32 0.0, %v2114
      %v2116 = vpop.f32.mrf.mxu0
      %2117 = vmatprep.mubr.f32.mxu0 0.0
      %2118 = vmatmul.mubr.f32.gmra.mxu0 %v1958
      %v2119 = vpop.f32.mrf.mxu0
      %v2120 = vadd.f32 0.0, %v2119
      %v2121 = vpop.f32.mrf.mxu0
      %2122 = vmatprep.mubr.f32.mxu0 0.0
      %2123 = vmatmul.mubr.f32.gmra.mxu0 %v1961
      %v2124 = vpop.f32.mrf.mxu0
      %v2125 = vadd.f32 0.0, %v2124
      %v2126 = vpop.f32.mrf.mxu0
      %2127 = vmatprep.mubr.f32.mxu0 0.0
      %2128 = vmatmul.mubr.f32.gmra.mxu0 %v1964
      %v2129 = vpop.f32.mrf.mxu0
      %v2130 = vadd.f32 0.0, %v2129
      %v2131 = vpop.f32.mrf.mxu0
      %2132 = vmatprep.mubr.f32.mxu0 0.0
      %2133 = vmatmul.mubr.f32.gmra.mxu0 %v1967
      %v2134 = vpop.f32.mrf.mxu0
      %v2135 = vadd.f32 0.0, %v2134
      %v2136 = vpop.f32.mrf.mxu0
      %2137 = vdwg.mxu0
      %v2138 = vmul.f32 %v1887, %v2040
      %v2139 = vmul.f32 %v1888, %v2045
      %v2140 = vmul.f32 %v1889, %v2050
      %v2141 = vmul.f32 %v1890, %v2055
      %v2142 = vmul.f32 %v1891, %v2060
      %v2143 = vmul.f32 %v1892, %v2065
      %v2144 = vmul.f32 %v1893, %v2070
      %v2145 = vmul.f32 %v1894, %v2075
      %v2146 = vmul.f32 %v1895, %v2080
      %v2147 = vmul.f32 %v1896, %v2085
      %v2148 = vmul.f32 %v1897, %v2090
      %v2149 = vmul.f32 %v1898, %v2095
      %v2150 = vmul.f32 %v1899, %v2100
      %v2151 = vmul.f32 %v1900, %v2105
      %v2152 = vmul.f32 %v1901, %v2110
      %v2153 = vmul.f32 %v1902, %v2115
      %v2154 = vmul.f32 %v1903, %v2120
      %v2155 = vmul.f32 %v1904, %v2125
      %v2156 = vmul.f32 %v1905, %v2130
      %v2157 = vmul.f32 %v1906, %v2135
      %v2158 = vld [vmem:[%s11] sm:$0xff]
      %v2159 = vld [vmem:[%s11 + $0x8] sm:$0xff]
      %v2160 = vld [vmem:[%s11 + $0x10] sm:$0xff]
      %v2161 = vld [vmem:[%s11 + $0x18] sm:$0xff]
      %v2162 = vld [vmem:[%s11 + $0x20] sm:$0xff]
      %v2163 = vld [vmem:[%s11 + $0x28] sm:$0xff]
      %v2164 = vld [vmem:[%s11 + $0x30] sm:$0xff]
      %v2165 = vld [vmem:[%s11 + $0x38] sm:$0xff]
      %v2167 = vsel %vm1661, %v2138, 0
      %v2170 = vsel %vm1661, %v2139, 0
      %v2173 = vsel %vm1661, %v2140, 0
      %v2176 = vsel %vm1661, %v2141, 0
      %v2179 = vsel %vm1661, %v2142, 0
      %v2182 = vsel %vm1661, %v2143, 0
      %v2185 = vsel %vm1661, %v2144, 0
      %v2188 = vsel %vm1661, %v2145, 0
      %v2191 = vsel %vm1661, %v2146, 0
      %v2194 = vsel %vm1661, %v2147, 0
      %v2197 = vsel %vm1661, %v2148, 0
      %v2200 = vsel %vm1661, %v2149, 0
      %v2203 = vsel %vm1661, %v2150, 0
      %v2206 = vsel %vm1661, %v2151, 0
      %v2209 = vsel %vm1661, %v2152, 0
      %v2212 = vsel %vm1661, %v2153, 0
      %v2215 = vsel %vm1661, %v2154, 0
      %v2218 = vsel %vm1661, %v2155, 0
      %v2221 = vsel %vm1661, %v2156, 0
      %v2224 = vsel %vm1661, %v2157, 0
      %2226 = vmatprep.subr.mxu0 0.0
      %2227 = vmatpush1.msra.mxu0 0.0
      %2228 = vmatprep.subr.mxu0 0.0
      %2229 = vmatpush1.msra.mxu0 0.0
      %2230 = vmatprep.subr.mxu0 0.0
      %2231 = vmatpush1.msra.mxu0 0.0
      %2232 = vmatprep.subr.mxu0 0.0
      %2233 = vmatpush1.msra.mxu0 0.0
      %2234 = vmatprep.subr.mxu0 0.0
      %2235 = vmatpush1.msra.mxu0 0.0
      %2236 = vmatprep.subr.mxu0 0.0
      %2237 = vmatpush1.msra.mxu0 0.0
      %2238 = vmatprep.subr.mxu0 0.0
      %2239 = vmatpush1.msra.mxu0 0.0
      %2240 = vmatprep.subr.mxu0 0.0
      %2241 = vmatpush1.msra.mxu0 0.0
      %2242 = vmatprep.subr.mxu0 0.0
      %2243 = vmatpush1.msra.mxu0 %v2165
      %2244 = vmatprep.subr.mxu0 0.0
      %2245 = vmatpush1.msra.mxu0 %v2164
      %2246 = vmatprep.subr.mxu0 0.0
      %2247 = vmatpush1.msra.mxu0 %v2163
      %2248 = vmatprep.subr.mxu0 0.0
      %2249 = vmatpush1.msra.mxu0 %v2162
      %2250 = vmatprep.subr.mxu0 0.0
      %2251 = vmatpush1.msra.mxu0 %v2161
      %2252 = vmatprep.subr.mxu0 0.0
      %2253 = vmatpush1.msra.mxu0 %v2160
      %2254 = vmatprep.subr.mxu0 0.0
      %2255 = vmatpush1.msra.mxu0 %v2159
      %2256 = vmatprep.subr.mxu0 0.0
      %2257 = vmatpush1.msra.mxu0 %v2158
      %2258 = vmatprep.subr.mxu0 0.0
      %2259 = vmatpush2.msra.mxu0 0.0
      %2260 = vmatprep.subr.mxu0 0.0
      %2261 = vmatpush2.msra.mxu0 0.0
      %2262 = vmatprep.subr.mxu0 0.0
      %2263 = vmatpush2.msra.mxu0 0.0
      %2264 = vmatprep.subr.mxu0 0.0
      %2265 = vmatpush2.msra.mxu0 0.0
      %2266 = vmatprep.subr.mxu0 0.0
      %2267 = vmatpush2.msra.mxu0 0.0
      %2268 = vmatprep.subr.mxu0 0.0
      %2269 = vmatpush2.msra.mxu0 0.0
      %2270 = vmatprep.subr.mxu0 0.0
      %2271 = vmatpush2.msra.mxu0 0.0
      %2272 = vmatprep.subr.mxu0 0.0
      %2273 = vmatpush2.msra.mxu0 0.0
      %2274 = vmatprep.subr.mxu0 0.0
      %2275 = vmatpush2.msra.mxu0 0.0
      %2276 = vmatprep.subr.mxu0 0.0
      %2277 = vmatpush2.msra.mxu0 0.0
      %2278 = vmatprep.subr.mxu0 0.0
      %2279 = vmatpush2.msra.mxu0 0.0
      %2280 = vmatprep.subr.mxu0 0.0
      %2281 = vmatpush2.msra.mxu0 0.0
      %2282 = vmatprep.subr.mxu0 0.0
      %2283 = vmatpush2.msra.mxu0 0.0
      %2284 = vmatprep.subr.mxu0 0.0
      %2285 = vmatpush2.msra.mxu0 0.0
      %2286 = vmatprep.subr.mxu0 0.0
      %2287 = vmatpush2.msra.mxu0 0.0
      %2288 = vmatprep.subr.mxu0 0.0
      %2289 = vmatpush2.msra.mxu0 0.0
      %2290 = vmatprep.mubr.f32.mxu0 0.0
      %2291 = vmatmul.mubr.f32.gmra.mxu0 %v2167
      %v2292 = vpop.f32.mrf.mxu0
      %v2293 = vadd.f32 0.0, %v2292
      %v2294 = vpop.f32.mrf.mxu0
      %2295 = vmatprep.mubr.f32.mxu0 0.0
      %2296 = vmatmul.mubr.f32.gmra.mxu0 %v2170
      %v2297 = vpop.f32.mrf.mxu0
      %v2298 = vadd.f32 0.0, %v2297
      %v2299 = vpop.f32.mrf.mxu0
      %2300 = vmatprep.mubr.f32.mxu0 0.0
      %2301 = vmatmul.mubr.f32.gmra.mxu0 %v2173
      %v2302 = vpop.f32.mrf.mxu0
      %v2303 = vadd.f32 0.0, %v2302
      %v2304 = vpop.f32.mrf.mxu0
      %2305 = vmatprep.mubr.f32.mxu0 0.0
      %2306 = vmatmul.mubr.f32.gmra.mxu0 %v2176
      %v2307 = vpop.f32.mrf.mxu0
      %v2308 = vadd.f32 0.0, %v2307
      %v2309 = vpop.f32.mrf.mxu0
      %2310 = vmatprep.mubr.f32.mxu0 0.0
      %2311 = vmatmul.mubr.f32.gmra.mxu0 %v2179
      %v2312 = vpop.f32.mrf.mxu0
      %v2313 = vadd.f32 0.0, %v2312
      %v2314 = vpop.f32.mrf.mxu0
      %2315 = vmatprep.mubr.f32.mxu0 0.0
      %2316 = vmatmul.mubr.f32.gmra.mxu0 %v2182
      %v2317 = vpop.f32.mrf.mxu0
      %v2318 = vadd.f32 0.0, %v2317
      %v2319 = vpop.f32.mrf.mxu0
      %2320 = vmatprep.mubr.f32.mxu0 0.0
      %2321 = vmatmul.mubr.f32.gmra.mxu0 %v2185
      %v2322 = vpop.f32.mrf.mxu0
      %v2323 = vadd.f32 0.0, %v2322
      %v2324 = vpop.f32.mrf.mxu0
      %2325 = vmatprep.mubr.f32.mxu0 0.0
      %2326 = vmatmul.mubr.f32.gmra.mxu0 %v2188
      %v2327 = vpop.f32.mrf.mxu0
      %v2328 = vadd.f32 0.0, %v2327
      %v2329 = vpop.f32.mrf.mxu0
      %2330 = vmatprep.mubr.f32.mxu0 0.0
      %2331 = vmatmul.mubr.f32.gmra.mxu0 %v2191
      %v2332 = vpop.f32.mrf.mxu0
      %v2333 = vadd.f32 0.0, %v2332
      %v2334 = vpop.f32.mrf.mxu0
      %2335 = vmatprep.mubr.f32.mxu0 0.0
      %2336 = vmatmul.mubr.f32.gmra.mxu0 %v2194
      %v2337 = vpop.f32.mrf.mxu0
      %v2338 = vadd.f32 0.0, %v2337
      %v2339 = vpop.f32.mrf.mxu0
      %2340 = vmatprep.mubr.f32.mxu0 0.0
      %2341 = vmatmul.mubr.f32.gmra.mxu0 %v2197
      %v2342 = vpop.f32.mrf.mxu0
      %v2343 = vadd.f32 0.0, %v2342
      %v2344 = vpop.f32.mrf.mxu0
      %2345 = vmatprep.mubr.f32.mxu0 0.0
      %2346 = vmatmul.mubr.f32.gmra.mxu0 %v2200
      %v2347 = vpop.f32.mrf.mxu0
      %v2348 = vadd.f32 0.0, %v2347
      %v2349 = vpop.f32.mrf.mxu0
      %2350 = vmatprep.mubr.f32.mxu0 0.0
      %2351 = vmatmul.mubr.f32.gmra.mxu0 %v2203
      %v2352 = vpop.f32.mrf.mxu0
      %v2353 = vadd.f32 0.0, %v2352
      %v2354 = vpop.f32.mrf.mxu0
      %2355 = vmatprep.mubr.f32.mxu0 0.0
      %2356 = vmatmul.mubr.f32.gmra.mxu0 %v2206
      %v2357 = vpop.f32.mrf.mxu0
      %v2358 = vadd.f32 0.0, %v2357
      %v2359 = vpop.f32.mrf.mxu0
      %2360 = vmatprep.mubr.f32.mxu0 0.0
      %2361 = vmatmul.mubr.f32.gmra.mxu0 %v2209
      %v2362 = vpop.f32.mrf.mxu0
      %v2363 = vadd.f32 0.0, %v2362
      %v2364 = vpop.f32.mrf.mxu0
      %2365 = vmatprep.mubr.f32.mxu0 0.0
      %2366 = vmatmul.mubr.f32.gmra.mxu0 %v2212
      %v2367 = vpop.f32.mrf.mxu0
      %v2368 = vadd.f32 0.0, %v2367
      %v2369 = vpop.f32.mrf.mxu0
      %2370 = vmatprep.mubr.f32.mxu0 0.0
      %2371 = vmatmul.mubr.f32.gmra.mxu0 %v2215
      %v2372 = vpop.f32.mrf.mxu0
      %v2373 = vadd.f32 0.0, %v2372
      %v2374 = vpop.f32.mrf.mxu0
      %2375 = vmatprep.mubr.f32.mxu0 0.0
      %2376 = vmatmul.mubr.f32.gmra.mxu0 %v2218
      %v2377 = vpop.f32.mrf.mxu0
      %v2378 = vadd.f32 0.0, %v2377
      %v2379 = vpop.f32.mrf.mxu0
      %2380 = vmatprep.mubr.f32.mxu0 0.0
      %2381 = vmatmul.mubr.f32.gmra.mxu0 %v2221
      %v2382 = vpop.f32.mrf.mxu0
      %v2383 = vadd.f32 0.0, %v2382
      %v2384 = vpop.f32.mrf.mxu0
      %2385 = vmatprep.mubr.f32.mxu0 0.0
      %2386 = vmatmul.mubr.f32.gmra.mxu0 %v2224
      %v2387 = vpop.f32.mrf.mxu0
      %v2388 = vadd.f32 0.0, %v2387
      %v2389 = vpop.f32.mrf.mxu0
      %2390 = vdwg.mxu0
      %v2391 = vld [vmem:[%s4] sm:$0xff]
      %v2392 = vld [vmem:[%s4 + $0x8] sm:$0xff]
      %v2393 = vld [vmem:[%s4 + $0x10] sm:$0xff]
      %v2394 = vld [vmem:[%s4 + $0x18] sm:$0xff]
      %v2395 = vld [vmem:[%s4 + $0x20] sm:$0xff]
      %v2396 = vld [vmem:[%s4 + $0x28] sm:$0xff]
      %v2397 = vld [vmem:[%s4 + $0x30] sm:$0xff]
      %v2398 = vld [vmem:[%s4 + $0x38] sm:$0xff]
      %v2399 = vld [vmem:[%s4 + $0x40] sm:$0xff]
      %v2400 = vld [vmem:[%s4 + $0x48] sm:$0xff]
      %vm2401 = vcmask 261120
      %v2403 = vsel %vm2401, %v2392, 0
      %v2406 = vsel %vm2401, %v2394, 0
      %v2409 = vsel %vm2401, %v2396, 0
      %v2412 = vsel %vm2401, %v2398, 0
      %v2415 = vsel %vm2401, %v2400, 0
      %2417 = vmatprep.subr.mxu0 0.0
      %2418 = vmatpush1.msra.mxu0 %v2368
      %2419 = vmatprep.subr.mxu0 0.0
      %2420 = vmatpush1.msra.mxu0 %v2363
      %2421 = vmatprep.subr.mxu0 0.0
      %2422 = vmatpush1.msra.mxu0 %v2358
      %2423 = vmatprep.subr.mxu0 0.0
      %2424 = vmatpush1.msra.mxu0 %v2353
      %2425 = vmatprep.subr.mxu0 0.0
      %2426 = vmatpush1.msra.mxu0 %v2348
      %2427 = vmatprep.subr.mxu0 0.0
      %2428 = vmatpush1.msra.mxu0 %v2343
      %2429 = vmatprep.subr.mxu0 0.0
      %2430 = vmatpush1.msra.mxu0 %v2338
      %2431 = vmatprep.subr.mxu0 0.0
      %2432 = vmatpush1.msra.mxu0 %v2333
      %2433 = vmatprep.subr.mxu0 0.0
      %2434 = vmatpush1.msra.mxu0 %v2328
      %2435 = vmatprep.subr.mxu0 0.0
      %2436 = vmatpush1.msra.mxu0 %v2323
      %2437 = vmatprep.subr.mxu0 0.0
      %2438 = vmatpush1.msra.mxu0 %v2318
      %2439 = vmatprep.subr.mxu0 0.0
      %2440 = vmatpush1.msra.mxu0 %v2313
      %2441 = vmatprep.subr.mxu0 0.0
      %2442 = vmatpush1.msra.mxu0 %v2308
      %2443 = vmatprep.subr.mxu0 0.0
      %2444 = vmatpush1.msra.mxu0 %v2303
      %2445 = vmatprep.subr.mxu0 0.0
      %2446 = vmatpush1.msra.mxu0 %v2298
      %2447 = vmatprep.subr.mxu0 0.0
      %2448 = vmatpush1.msra.mxu0 %v2293
      %2449 = vmatprep.subr.mxu0 0.0
      %2450 = vmatpush2.msra.mxu0 0.0
      %2451 = vmatprep.subr.mxu0 0.0
      %2452 = vmatpush2.msra.mxu0 0.0
      %2453 = vmatprep.subr.mxu0 0.0
      %2454 = vmatpush2.msra.mxu0 0.0
      %2455 = vmatprep.subr.mxu0 0.0
      %2456 = vmatpush2.msra.mxu0 0.0
      %2457 = vmatprep.subr.mxu0 0.0
      %2458 = vmatpush2.msra.mxu0 0.0
      %2459 = vmatprep.subr.mxu0 0.0
      %2460 = vmatpush2.msra.mxu0 0.0
      %2461 = vmatprep.subr.mxu0 0.0
      %2462 = vmatpush2.msra.mxu0 0.0
      %2463 = vmatprep.subr.mxu0 0.0
      %2464 = vmatpush2.msra.mxu0 0.0
      %2465 = vmatprep.subr.mxu0 0.0
      %2466 = vmatpush2.msra.mxu0 0.0
      %2467 = vmatprep.subr.mxu0 0.0
      %2468 = vmatpush2.msra.mxu0 0.0
      %2469 = vmatprep.subr.mxu0 0.0
      %2470 = vmatpush2.msra.mxu0 0.0
      %2471 = vmatprep.subr.mxu0 0.0
      %2472 = vmatpush2.msra.mxu0 0.0
      %2473 = vmatprep.subr.mxu0 0.0
      %2474 = vmatpush2.msra.mxu0 %v2388
      %2475 = vmatprep.subr.mxu0 0.0
      %2476 = vmatpush2.msra.mxu0 %v2383
      %2477 = vmatprep.subr.mxu0 0.0
      %2478 = vmatpush2.msra.mxu0 %v2378
      %2479 = vmatprep.subr.mxu0 0.0
      %2480 = vmatpush2.msra.mxu0 %v2373
      %2481 = vmatprep.mubr.f32.mxu0 %v2403
      %2482 = vmatmul.mubr.f32.gmra.mxu0 %v2391
      %v2483 = vpop.f32.mrf.mxu0
      %v2484 = vadd.f32 0.0, %v2483
      %v2485 = vpop.f32.mrf.mxu0
      %2486 = vmatprep.mubr.f32.mxu0 %v2406
      %2487 = vmatmul.mubr.f32.gmra.mxu0 %v2393
      %v2488 = vpop.f32.mrf.mxu0
      %v2489 = vadd.f32 0.0, %v2488
      %v2490 = vpop.f32.mrf.mxu0
      %2491 = vmatprep.mubr.f32.mxu0 %v2409
      %2492 = vmatmul.mubr.f32.gmra.mxu0 %v2395
      %v2493 = vpop.f32.mrf.mxu0
      %v2494 = vadd.f32 0.0, %v2493
      %v2495 = vpop.f32.mrf.mxu0
      %2496 = vmatprep.mubr.f32.mxu0 %v2412
      %2497 = vmatmul.mubr.f32.gmra.mxu0 %v2397
      %v2498 = vpop.f32.mrf.mxu0
      %v2499 = vadd.f32 0.0, %v2498
      %v2500 = vpop.f32.mrf.mxu0
      %2501 = vmatprep.mubr.f32.mxu0 %v2415
      %2502 = vmatmul.mubr.f32.gmra.mxu0 %v2399
      %v2503 = vpop.f32.mrf.mxu0
      %v2504 = vadd.f32 0.0, %v2503
      %v2505 = vpop.f32.mrf.mxu0
      %2506 = vdwg.mxu0
      %v2507 = vld [vmem:[%s12] sm:$0xf]
      %v2508 = vld [vmem:[%s13] sm:$0xff]
      %v2509 = vld [vmem:[%s13 + $0x8] sm:$0xff]
      %v2510 = vld [vmem:[%s13 + $0x10] sm:$0xff]
      %v2511 = vld [vmem:[%s13 + $0x18] sm:$0xff]
      %v2513 = vsel %vm2401, %v2484, 0
      %v2516 = vsel %vm2401, %v2489, 0
      %v2519 = vsel %vm2401, %v2494, 0
      %v2522 = vsel %vm2401, %v2499, 0
      %v2525 = vsel %vm2401, %v2504, 0
      %2527 = vmatprep.subr.mxu0 0.0
      %2528 = vmatpush1.msra.mxu0 0.0
      %2529 = vmatprep.subr.mxu0 0.0
      %2530 = vmatpush1.msra.mxu0 0.0
      %2531 = vmatprep.subr.mxu0 0.0
      %2532 = vmatpush1.msra.mxu0 0.0
      %2533 = vmatprep.subr.mxu0 0.0
      %2534 = vmatpush1.msra.mxu0 0.0
      %2535 = vmatprep.subr.mxu0 0.0
      %2536 = vmatpush1.msra.mxu0 0.0
      %2537 = vmatprep.subr.mxu0 0.0
      %2538 = vmatpush1.msra.mxu0 0.0
      %2539 = vmatprep.subr.mxu0 0.0
      %2540 = vmatpush1.msra.mxu0 0.0
      %2541 = vmatprep.subr.mxu0 0.0
      %2542 = vmatpush1.msra.mxu0 0.0
      %2543 = vmatprep.subr.mxu0 0.0
      %2544 = vmatpush1.msra.mxu0 0.0
      %2545 = vmatprep.subr.mxu0 0.0
      %2546 = vmatpush1.msra.mxu0 0.0
      %2547 = vmatprep.subr.mxu0 0.0
      %2548 = vmatpush1.msra.mxu0 0.0
      %2549 = vmatprep.subr.mxu0 0.0
      %2550 = vmatpush1.msra.mxu0 0.0
      %2551 = vmatprep.subr.mxu0 0.0
      %2552 = vmatpush1.msra.mxu0 %v2511
      %2553 = vmatprep.subr.mxu0 0.0
      %2554 = vmatpush1.msra.mxu0 %v2510
      %2555 = vmatprep.subr.mxu0 0.0
      %2556 = vmatpush1.msra.mxu0 %v2509
      %2557 = vmatprep.subr.mxu0 0.0
      %2558 = vmatpush1.msra.mxu0 %v2508
      %2559 = vmatprep.subr.mxu0 0.0
      %2560 = vmatpush2.msra.mxu0 0.0
      %2561 = vmatprep.subr.mxu0 0.0
      %2562 = vmatpush2.msra.mxu0 0.0
      %2563 = vmatprep.subr.mxu0 0.0
      %2564 = vmatpush2.msra.mxu0 0.0
      %2565 = vmatprep.subr.mxu0 0.0
      %2566 = vmatpush2.msra.mxu0 0.0
      %2567 = vmatprep.subr.mxu0 0.0
      %2568 = vmatpush2.msra.mxu0 0.0
      %2569 = vmatprep.subr.mxu0 0.0
      %2570 = vmatpush2.msra.mxu0 0.0
      %2571 = vmatprep.subr.mxu0 0.0
      %2572 = vmatpush2.msra.mxu0 0.0
      %2573 = vmatprep.subr.mxu0 0.0
      %2574 = vmatpush2.msra.mxu0 0.0
      %2575 = vmatprep.subr.mxu0 0.0
      %2576 = vmatpush2.msra.mxu0 0.0
      %2577 = vmatprep.subr.mxu0 0.0
      %2578 = vmatpush2.msra.mxu0 0.0
      %2579 = vmatprep.subr.mxu0 0.0
      %2580 = vmatpush2.msra.mxu0 0.0
      %2581 = vmatprep.subr.mxu0 0.0
      %2582 = vmatpush2.msra.mxu0 0.0
      %2583 = vmatprep.subr.mxu0 0.0
      %2584 = vmatpush2.msra.mxu0 0.0
      %2585 = vmatprep.subr.mxu0 0.0
      %2586 = vmatpush2.msra.mxu0 0.0
      %2587 = vmatprep.subr.mxu0 0.0
      %2588 = vmatpush2.msra.mxu0 0.0
      %2589 = vmatprep.subr.mxu0 0.0
      %2590 = vmatpush2.msra.mxu0 0.0
      %2591 = vmatprep.mubr.f32.mxu0 0.0
      %2592 = vmatmul.mubr.f32.gmra.mxu0 %v2513
      %v2593 = vpop.f32.mrf.mxu0
      %v2594 = vadd.f32 0.0, %v2593
      %v2595 = vpop.f32.mrf.mxu0
      %2596 = vmatprep.mubr.f32.mxu0 0.0
      %2597 = vmatmul.mubr.f32.gmra.mxu0 %v2516
      %v2598 = vpop.f32.mrf.mxu0
      %v2599 = vadd.f32 0.0, %v2598
      %v2600 = vpop.f32.mrf.mxu0
      %2601 = vmatprep.mubr.f32.mxu0 0.0
      %2602 = vmatmul.mubr.f32.gmra.mxu0 %v2519
      %v2603 = vpop.f32.mrf.mxu0
      %v2604 = vadd.f32 0.0, %v2603
      %v2605 = vpop.f32.mrf.mxu0
      %2606 = vmatprep.mubr.f32.mxu0 0.0
      %2607 = vmatmul.mubr.f32.gmra.mxu0 %v2522
      %v2608 = vpop.f32.mrf.mxu0
      %v2609 = vadd.f32 0.0, %v2608
      %v2610 = vpop.f32.mrf.mxu0
      %2611 = vmatprep.mubr.f32.mxu0 0.0
      %2612 = vmatmul.mubr.f32.gmra.mxu0 %v2525
      %v2613 = vpop.f32.mrf.mxu0
      %v2614 = vadd.f32 0.0, %v2613
      %v2615 = vpop.f32.mrf.mxu0
      %2616 = vdwg.mxu0
      %v2618 = vsel %vm1141, %v623, 0
      %v2621 = vsel %vm1141, %v624, 0
      %v2624 = vsel %vm1141, %v625, 0
      %v2627 = vsel %vm1141, %v626, 0
      %v2630 = vsel %vm1141, %v627, 0
      %v2633 = vsel %vm1202, %v2507, 0
      %2635 = vmatprep.subr.mxu0 0.0
      %2636 = vmatpush1.msra.mxu0 0.0
      %2637 = vmatprep.subr.mxu0 0.0
      %2638 = vmatpush1.msra.mxu0 0.0
      %2639 = vmatprep.subr.mxu0 0.0
      %2640 = vmatpush1.msra.mxu0 0.0
      %2641 = vmatprep.subr.mxu0 0.0
      %2642 = vmatpush1.msra.mxu0 0.0
      %2643 = vmatprep.subr.mxu0 0.0
      %2644 = vmatpush1.msra.mxu0 0.0
      %2645 = vmatprep.subr.mxu0 0.0
      %2646 = vmatpush1.msra.mxu0 0.0
      %2647 = vmatprep.subr.mxu0 0.0
      %2648 = vmatpush1.msra.mxu0 0.0
      %2649 = vmatprep.subr.mxu0 0.0
      %2650 = vmatpush1.msra.mxu0 0.0
      %2651 = vmatprep.subr.mxu0 0.0
      %2652 = vmatpush1.msra.mxu0 0.0
      %2653 = vmatprep.subr.mxu0 0.0
      %2654 = vmatpush1.msra.mxu0 0.0
      %2655 = vmatprep.subr.mxu0 0.0
      %2656 = vmatpush1.msra.mxu0 0.0
      %2657 = vmatprep.subr.mxu0 0.0
      %2658 = vmatpush1.msra.mxu0 0.0
      %2659 = vmatprep.subr.mxu0 0.0
      %2660 = vmatpush1.msra.mxu0 0.0
      %2661 = vmatprep.subr.mxu0 0.0
      %2662 = vmatpush1.msra.mxu0 0.0
      %2663 = vmatprep.subr.mxu0 0.0
      %2664 = vmatpush1.msra.mxu0 0.0
      %2665 = vmatprep.subr.mxu0 0.0
      %2666 = vmatpush1.msra.mxu0 %v2633
      %2667 = vmatprep.subr.mxu0 0.0
      %2668 = vmatpush2.msra.mxu0 0.0
      %2669 = vmatprep.subr.mxu0 0.0
      %2670 = vmatpush2.msra.mxu0 0.0
      %2671 = vmatprep.subr.mxu0 0.0
      %2672 = vmatpush2.msra.mxu0 0.0
      %2673 = vmatprep.subr.mxu0 0.0
      %2674 = vmatpush2.msra.mxu0 0.0
      %2675 = vmatprep.subr.mxu0 0.0
      %2676 = vmatpush2.msra.mxu0 0.0
      %2677 = vmatprep.subr.mxu0 0.0
      %2678 = vmatpush2.msra.mxu0 0.0
      %2679 = vmatprep.subr.mxu0 0.0
      %2680 = vmatpush2.msra.mxu0 0.0
      %2681 = vmatprep.subr.mxu0 0.0
      %2682 = vmatpush2.msra.mxu0 0.0
      %2683 = vmatprep.subr.mxu0 0.0
      %2684 = vmatpush2.msra.mxu0 0.0
      %2685 = vmatprep.subr.mxu0 0.0
      %2686 = vmatpush2.msra.mxu0 0.0
      %2687 = vmatprep.subr.mxu0 0.0
      %2688 = vmatpush2.msra.mxu0 0.0
      %2689 = vmatprep.subr.mxu0 0.0
      %2690 = vmatpush2.msra.mxu0 0.0
      %2691 = vmatprep.subr.mxu0 0.0
      %2692 = vmatpush2.msra.mxu0 0.0
      %2693 = vmatprep.subr.mxu0 0.0
      %2694 = vmatpush2.msra.mxu0 0.0
      %2695 = vmatprep.subr.mxu0 0.0
      %2696 = vmatpush2.msra.mxu0 0.0
      %2697 = vmatprep.subr.mxu0 0.0
      %2698 = vmatpush2.msra.mxu0 0.0
      %2699 = vmatprep.mubr.f32.mxu0 0.0
      %2700 = vmatmul.mubr.f32.gmra.mxu0 %v2618
      %v2701 = vpop.f32.mrf.mxu0
      %v2702 = vadd.f32 %v2594, %v2701
      %v2703 = vpop.f32.mrf.mxu0
      %2704 = vmatprep.mubr.f32.mxu0 0.0
      %2705 = vmatmul.mubr.f32.gmra.mxu0 %v2621
      %v2706 = vpop.f32.mrf.mxu0
      %v2707 = vadd.f32 %v2599, %v2706
      %v2708 = vpop.f32.mrf.mxu0
      %2709 = vmatprep.mubr.f32.mxu0 0.0
      %2710 = vmatmul.mubr.f32.gmra.mxu0 %v2624
      %v2711 = vpop.f32.mrf.mxu0
      %v2712 = vadd.f32 %v2604, %v2711
      %v2713 = vpop.f32.mrf.mxu0
      %2714 = vmatprep.mubr.f32.mxu0 0.0
      %2715 = vmatmul.mubr.f32.gmra.mxu0 %v2627
      %v2716 = vpop.f32.mrf.mxu0
      %v2717 = vadd.f32 %v2609, %v2716
      %v2718 = vpop.f32.mrf.mxu0
      %2719 = vmatprep.mubr.f32.mxu0 0.0
      %2720 = vmatmul.mubr.f32.gmra.mxu0 %v2630
      %v2721 = vpop.f32.mrf.mxu0
      %v2722 = vadd.f32 %v2614, %v2721
      %v2723 = vpop.f32.mrf.mxu0
      %2724 = vdwg.mxu0
      %v2725 = vld [vmem:[%s14] sm:$0x1]
      %v2727 = vlaneseq
      %v2728 = vshrl.u32 %v2727, 7
      %v2729 = vsub.s32 0, %v2728
      %v2730 = vrot.slane %v2725, %v2729
      %v2732 = vadd.f32 %v2702, %v2730
      %v2733 = vadd.f32 %v2707, %v2730
      %v2734 = vadd.f32 %v2712, %v2730
      %v2735 = vadd.f32 %v2717, %v2730
      %v2736 = vadd.f32 %v2722, %v2730
      %v2737 = vmax.f32 %v2732, 0.0
      %v2738 = vmax.f32 %v2733, 0.0
      %v2739 = vmax.f32 %v2734, 0.0
      %v2740 = vmax.f32 %v2735, 0.0
      %v2741 = vmax.f32 %v2736, 0.0
      %v2742 = vld [vmem:[%s15] sm:$0xff]
      %v2743 = vld [vmem:[%s15 + $0x8] sm:$0xff]
      %v2744 = vld [vmem:[%s15 + $0x10] sm:$0xff]
      %v2745 = vld [vmem:[%s15 + $0x18] sm:$0xff]
      %v2746 = vld [vmem:[%s16] sm:$0x1]
      %v2748 = vlaneseq
      %v2749 = vshrl.u32 %v2748, 7
      %v2750 = vsub.s32 0, %v2749
      %v2751 = vrot.slane %v2746, %v2750
      %v2754 = vsel %vm2401, %v2737, 0
      %v2757 = vsel %vm2401, %v2738, 0
      %v2760 = vsel %vm2401, %v2739, 0
      %v2763 = vsel %vm2401, %v2740, 0
      %v2766 = vsel %vm2401, %v2741, 0
      %2768 = vmatprep.subr.mxu0 0.0
      %2769 = vmatpush1.msra.mxu0 0.0
      %2770 = vmatprep.subr.mxu0 0.0
      %2771 = vmatpush1.msra.mxu0 0.0
      %2772 = vmatprep.subr.mxu0 0.0
      %2773 = vmatpush1.msra.mxu0 0.0
      %2774 = vmatprep.subr.mxu0 0.0
      %2775 = vmatpush1.msra.mxu0 0.0
      %2776 = vmatprep.subr.mxu0 0.0
      %2777 = vmatpush1.msra.mxu0 0.0
      %2778 = vmatprep.subr.mxu0 0.0
      %2779 = vmatpush1.msra.mxu0 0.0
      %2780 = vmatprep.subr.mxu0 0.0
      %2781 = vmatpush1.msra.mxu0 0.0
      %2782 = vmatprep.subr.mxu0 0.0
      %2783 = vmatpush1.msra.mxu0 0.0
      %2784 = vmatprep.subr.mxu0 0.0
      %2785 = vmatpush1.msra.mxu0 0.0
      %2786 = vmatprep.subr.mxu0 0.0
      %2787 = vmatpush1.msra.mxu0 0.0
      %2788 = vmatprep.subr.mxu0 0.0
      %2789 = vmatpush1.msra.mxu0 0.0
      %2790 = vmatprep.subr.mxu0 0.0
      %2791 = vmatpush1.msra.mxu0 0.0
      %2792 = vmatprep.subr.mxu0 0.0
      %2793 = vmatpush1.msra.mxu0 %v2745
      %2794 = vmatprep.subr.mxu0 0.0
      %2795 = vmatpush1.msra.mxu0 %v2744
      %2796 = vmatprep.subr.mxu0 0.0
      %2797 = vmatpush1.msra.mxu0 %v2743
      %2798 = vmatprep.subr.mxu0 0.0
      %2799 = vmatpush1.msra.mxu0 %v2742
      %2800 = vmatprep.subr.mxu0 0.0
      %2801 = vmatpush2.msra.mxu0 0.0
      %2802 = vmatprep.subr.mxu0 0.0
      %2803 = vmatpush2.msra.mxu0 0.0
      %2804 = vmatprep.subr.mxu0 0.0
      %2805 = vmatpush2.msra.mxu0 0.0
      %2806 = vmatprep.subr.mxu0 0.0
      %2807 = vmatpush2.msra.mxu0 0.0
      %2808 = vmatprep.subr.mxu0 0.0
      %2809 = vmatpush2.msra.mxu0 0.0
      %2810 = vmatprep.subr.mxu0 0.0
      %2811 = vmatpush2.msra.mxu0 0.0
      %2812 = vmatprep.subr.mxu0 0.0
      %2813 = vmatpush2.msra.mxu0 0.0
      %2814 = vmatprep.subr.mxu0 0.0
      %2815 = vmatpush2.msra.mxu0 0.0
      %2816 = vmatprep.subr.mxu0 0.0
      %2817 = vmatpush2.msra.mxu0 0.0
      %2818 = vmatprep.subr.mxu0 0.0
      %2819 = vmatpush2.msra.mxu0 0.0
      %2820 = vmatprep.subr.mxu0 0.0
      %2821 = vmatpush2.msra.mxu0 0.0
      %2822 = vmatprep.subr.mxu0 0.0
      %2823 = vmatpush2.msra.mxu0 0.0
      %2824 = vmatprep.subr.mxu0 0.0
      %2825 = vmatpush2.msra.mxu0 0.0
      %2826 = vmatprep.subr.mxu0 0.0
      %2827 = vmatpush2.msra.mxu0 0.0
      %2828 = vmatprep.subr.mxu0 0.0
      %2829 = vmatpush2.msra.mxu0 0.0
      %2830 = vmatprep.subr.mxu0 0.0
      %2831 = vmatpush2.msra.mxu0 0.0
      %2832 = vmatprep.mubr.f32.mxu0 0.0
      %2833 = vmatmul.mubr.f32.gmra.mxu0 %v2754
      %v2834 = vpop.f32.mrf.mxu0
      %v2835 = vadd.f32 %v2751, %v2834
      %v2836 = vpop.f32.mrf.mxu0
      %2837 = vmatprep.mubr.f32.mxu0 0.0
      %2838 = vmatmul.mubr.f32.gmra.mxu0 %v2757
      %v2839 = vpop.f32.mrf.mxu0
      %v2840 = vadd.f32 %v2751, %v2839
      %v2841 = vpop.f32.mrf.mxu0
      %2842 = vmatprep.mubr.f32.mxu0 0.0
      %2843 = vmatmul.mubr.f32.gmra.mxu0 %v2760
      %v2844 = vpop.f32.mrf.mxu0
      %v2845 = vadd.f32 %v2751, %v2844
      %v2846 = vpop.f32.mrf.mxu0
      %2847 = vmatprep.mubr.f32.mxu0 0.0
      %2848 = vmatmul.mubr.f32.gmra.mxu0 %v2763
      %v2849 = vpop.f32.mrf.mxu0
      %v2850 = vadd.f32 %v2751, %v2849
      %v2851 = vpop.f32.mrf.mxu0
      %2852 = vmatprep.mubr.f32.mxu0 0.0
      %2853 = vmatmul.mubr.f32.gmra.mxu0 %v2766
      %v2854 = vpop.f32.mrf.mxu0
      %v2855 = vadd.f32 %v2751, %v2854
      %v2856 = vpop.f32.mrf.mxu0
      %2857 = vdwg.mxu0
      %v2858 = vmax.f32 %v2835, 0.0
      %v2859 = vmax.f32 %v2840, 0.0
      %v2860 = vmax.f32 %v2845, 0.0
      %v2861 = vmax.f32 %v2850, 0.0
      %v2862 = vmax.f32 %v2855, 0.0
      %v2863 = vld [vmem:[%s17] sm:$0xff]
      %v2864 = vld [vmem:[%s17 + $0x8] sm:$0xff]
      %v2865 = vld [vmem:[%s17 + $0x10] sm:$0xff]
      %v2866 = vld [vmem:[%s17 + $0x18] sm:$0xff]
      %v2867 = vld [vmem:[%s18] sm:$0x1]
      %v2869 = vlaneseq
      %v2870 = vshrl.u32 %v2869, 7
      %v2871 = vsub.s32 0, %v2870
      %v2872 = vrot.slane %v2867, %v2871
      %v2875 = vsel %vm2401, %v2858, 0
      %v2878 = vsel %vm2401, %v2859, 0
      %v2881 = vsel %vm2401, %v2860, 0
      %v2884 = vsel %vm2401, %v2861, 0
      %v2887 = vsel %vm2401, %v2862, 0
      %2889 = vmatprep.subr.mxu0 0.0
      %2890 = vmatpush1.msra.mxu0 0.0
      %2891 = vmatprep.subr.mxu0 0.0
      %2892 = vmatpush1.msra.mxu0 0.0
      %2893 = vmatprep.subr.mxu0 0.0
      %2894 = vmatpush1.msra.mxu0 0.0
      %2895 = vmatprep.subr.mxu0 0.0
      %2896 = vmatpush1.msra.mxu0 0.0
      %2897 = vmatprep.subr.mxu0 0.0
      %2898 = vmatpush1.msra.mxu0 0.0
      %2899 = vmatprep.subr.mxu0 0.0
      %2900 = vmatpush1.msra.mxu0 0.0
      %2901 = vmatprep.subr.mxu0 0.0
      %2902 = vmatpush1.msra.mxu0 0.0
      %2903 = vmatprep.subr.mxu0 0.0
      %2904 = vmatpush1.msra.mxu0 0.0
      %2905 = vmatprep.subr.mxu0 0.0
      %2906 = vmatpush1.msra.mxu0 0.0
      %2907 = vmatprep.subr.mxu0 0.0
      %2908 = vmatpush1.msra.mxu0 0.0
      %2909 = vmatprep.subr.mxu0 0.0
      %2910 = vmatpush1.msra.mxu0 0.0
      %2911 = vmatprep.subr.mxu0 0.0
      %2912 = vmatpush1.msra.mxu0 0.0
      %2913 = vmatprep.subr.mxu0 0.0
      %2914 = vmatpush1.msra.mxu0 %v2866
      %2915 = vmatprep.subr.mxu0 0.0
      %2916 = vmatpush1.msra.mxu0 %v2865
      %2917 = vmatprep.subr.mxu0 0.0
      %2918 = vmatpush1.msra.mxu0 %v2864
      %2919 = vmatprep.subr.mxu0 0.0
      %2920 = vmatpush1.msra.mxu0 %v2863
      %2921 = vmatprep.subr.mxu0 0.0
      %2922 = vmatpush2.msra.mxu0 0.0
      %2923 = vmatprep.subr.mxu0 0.0
      %2924 = vmatpush2.msra.mxu0 0.0
      %2925 = vmatprep.subr.mxu0 0.0
      %2926 = vmatpush2.msra.mxu0 0.0
      %2927 = vmatprep.subr.mxu0 0.0
      %2928 = vmatpush2.msra.mxu0 0.0
      %2929 = vmatprep.subr.mxu0 0.0
      %2930 = vmatpush2.msra.mxu0 0.0
      %2931 = vmatprep.subr.mxu0 0.0
      %2932 = vmatpush2.msra.mxu0 0.0
      %2933 = vmatprep.subr.mxu0 0.0
      %2934 = vmatpush2.msra.mxu0 0.0
      %2935 = vmatprep.subr.mxu0 0.0
      %2936 = vmatpush2.msra.mxu0 0.0
      %2937 = vmatprep.subr.mxu0 0.0
      %2938 = vmatpush2.msra.mxu0 0.0
      %2939 = vmatprep.subr.mxu0 0.0
      %2940 = vmatpush2.msra.mxu0 0.0
      %2941 = vmatprep.subr.mxu0 0.0
      %2942 = vmatpush2.msra.mxu0 0.0
      %2943 = vmatprep.subr.mxu0 0.0
      %2944 = vmatpush2.msra.mxu0 0.0
      %2945 = vmatprep.subr.mxu0 0.0
      %2946 = vmatpush2.msra.mxu0 0.0
      %2947 = vmatprep.subr.mxu0 0.0
      %2948 = vmatpush2.msra.mxu0 0.0
      %2949 = vmatprep.subr.mxu0 0.0
      %2950 = vmatpush2.msra.mxu0 0.0
      %2951 = vmatprep.subr.mxu0 0.0
      %2952 = vmatpush2.msra.mxu0 0.0
      %2953 = vmatprep.mubr.f32.mxu0 0.0
      %2954 = vmatmul.mubr.f32.gmra.mxu0 %v2875
      %v2955 = vpop.f32.mrf.mxu0
      %v2956 = vadd.f32 %v2872, %v2955
      %v2957 = vpop.f32.mrf.mxu0
      %2958 = vmatprep.mubr.f32.mxu0 0.0
      %2959 = vmatmul.mubr.f32.gmra.mxu0 %v2878
      %v2960 = vpop.f32.mrf.mxu0
      %v2961 = vadd.f32 %v2872, %v2960
      %v2962 = vpop.f32.mrf.mxu0
      %2963 = vmatprep.mubr.f32.mxu0 0.0
      %2964 = vmatmul.mubr.f32.gmra.mxu0 %v2881
      %v2965 = vpop.f32.mrf.mxu0
      %v2966 = vadd.f32 %v2872, %v2965
      %v2967 = vpop.f32.mrf.mxu0
      %2968 = vmatprep.mubr.f32.mxu0 0.0
      %2969 = vmatmul.mubr.f32.gmra.mxu0 %v2884
      %v2970 = vpop.f32.mrf.mxu0
      %v2971 = vadd.f32 %v2872, %v2970
      %v2972 = vpop.f32.mrf.mxu0
      %2973 = vmatprep.mubr.f32.mxu0 0.0
      %2974 = vmatmul.mubr.f32.gmra.mxu0 %v2887
      %v2975 = vpop.f32.mrf.mxu0
      %v2976 = vadd.f32 %v2872, %v2975
      %v2977 = vpop.f32.mrf.mxu0
      %2978 = vdwg.mxu0
      %v2979 = vadd.f32 %v623, %v2956
      %v2980 = vadd.f32 %v624, %v2961
      %v2981 = vadd.f32 %v625, %v2966
      %v2982 = vadd.f32 %v626, %v2971
      %v2983 = vadd.f32 %v627, %v2976
      %2984 = vst.msk [vmem:[%s622] sm:$0xff] %vm1141, %v2979
      %2985 = vst.msk [vmem:[%s622 + $0x8] sm:$0xff] %vm1141, %v2980
      %2986 = vst.msk [vmem:[%s622 + $0x10] sm:$0xff] %vm1141, %v2981
      %2987 = vst.msk [vmem:[%s622 + $0x18] sm:$0xff] %vm1141, %v2982
      %2988 = vst.msk [vmem:[%s622 + $0x20] sm:$0xff] %vm1141, %v2983
      %p2989 = scmp.lt.s32.totalorder %s30, 1
      %s2990 = scalar_select %p2989, %s30, 1
      %s2991 = smul.addr %s2990, 5
      %s2992 = smul.addr %s2991, 8
      %s2993 = scalar_lea.vmem %s19, %s2992
      // Predicated region
      $region97: #{mlp_decoder_forward.1} parent=95 // pred_check
        %p2994 = pneg %p457
      $region98: #{mlp_decoder_forward.1} parent=95 // pred_check_branch
        %2996 = sbr.rel (%p2994) target = $region100
      $region99: #{mlp_decoder_forward.1} parent=95 // pred_region
        _
      $region100: #{mlp_decoder_forward.1} parent=95 // pred_fallthru
        _
    $region96: #{mlp_decoder_forward.1} parent=5 // pred_fallthru
      _
    %p2997 = scmp.le.s32.totalorder 2, %s25
    // Predicated region
    $region101: #{mlp_decoder_forward.1} parent=5 // pred_check
      %p2998 = pneg %p2997
    $region102: #{mlp_decoder_forward.1} parent=5 // pred_check_branch
      %3000 = sbr.rel (%p2998) target = $region104
    $region103: #{mlp_decoder_forward.1} parent=5 // pred_region
      %s3001 = ssub.s32 %s25, 2
      // Predicated region
      $region105: #{mlp_decoder_forward.1} parent=103 // pred_check
        %p3002 = pneg %p463
      $region106: #{mlp_decoder_forward.1} parent=103 // pred_check_branch
        %3004 = sbr.rel (%p3002) target = $region108
      $region107: #{mlp_decoder_forward.1} parent=103 // pred_region
        %p3005 = scmp.lt.s32.totalorder %s31, 1
        %s3006 = scalar_select %p3005, %s31, 1
        %s3007 = smul.addr %s3006, 5
        %s3008 = smul.addr %s3007, 8
        %s3009 = scalar_lea.vmem %s19, %s3008
      $region108: #{mlp_decoder_forward.1} parent=103 // pred_fallthru
        _
    $region104: #{mlp_decoder_forward.1} parent=5 // pred_fallthru
      _
  $region6: #{mlp_decoder_forward.1} parent=0 // loop_footer
    %s29 = sadd.s32 1, %s25
  $region7: #{mlp_decoder_forward.1} parent=0 // loop_footer_branch
    %24 = sbr.rel target = $region3
  $region8: #{mlp_decoder_forward.1} parent=0 // loop_exit
    _

</llo_original>
